<compile_context>
chip_gen: v5e
topology: v5e:2x2
jax: 0.10.0
libtpu: 0.0.40
codegen_flags: <defaults>
</compile_context>

<pallas_src>
import functools

import jax
import jax.numpy as jnp
from jax.experimental import pallas as pl
from jax.experimental.pallas import tpu as pltpu


# ----------------------------------------------------------------------------
# Pallas kernel: halo-blocked direct conv + folded BN bias + ReLU.
# ----------------------------------------------------------------------------
def _conv_bn_relu_kernel(xa_ref, xb_ref, w_ref, b_ref, o_ref):
    # xa_ref: (tile_h, Wp, Cin)   bf16  padded input rows [t*tile_h, (t+1)*tile_h)
    # xb_ref: (tile_h, Wp, Cin)   bf16  next row block (supplies the kh-1 halo rows)
    # w_ref:  (kh, kw, Cin, Cout) bf16  BN-scale-folded weights (VMEM resident)
    # b_ref:  (1, Cout)           f32   folded conv-bias + BN shift (VMEM resident)
    # o_ref:  (tile_h, Wo, Cout)  bf16  output tile
    th, wo, cout = o_ref.shape
    kh, kw, cin, _ = w_ref.shape

    x = jnp.concatenate([xa_ref[...], xb_ref[...]], axis=0)   # (2*tile_h, Wp, Cin)
    w = w_ref[...]

    acc = jnp.zeros((th * wo, cout), jnp.float32)
    # Static unroll: kh*kw shifted (Cin x Cout) matmuls, f32 accumulation.
    for di in range(kh):
        for dj in range(kw):
            win = x[di:di + th, dj:dj + wo, :].reshape(th * wo, cin)
            acc = acc + jnp.dot(win, w[di, dj],
                                preferred_element_type=jnp.float32)

    y = jnp.maximum(acc + b_ref[...], 0.0)
    o_ref[...] = y.reshape(th, wo, cout).astype(o_ref.dtype)


def _choose_tile_h(Ho, N, kh, *, min_steps=4, max_rows=128):
    """Pick the output-row tile height.

    Prefers (a) at least `min_steps` total grid steps so the software pipeline
    has depth and both v7x TensorCores get >= 2 steps each under "parallel"
    semantics, (b) tile heights dividing Ho (no output-row pad / final slice),
    and (c) tile_h >= kh-1 so a single +1 halo block covers the window.
    """
    lo = max(kh - 1, 1)
    hi = max(lo, min(Ho, max_rows))
    for th in range(hi, lo - 1, -1):
        if Ho % th == 0 and N * (-(-Ho // th)) >= min_steps:
            return th
    for th in range(hi, lo - 1, -1):
        if N * (-(-Ho // th)) >= min_steps:
            return th
    return hi


# ----------------------------------------------------------------------------
# conv_block forward (NHWC core): conv(kh x kw, stride 1, pad) -> BN(eval) -> ReLU
# ----------------------------------------------------------------------------
def conv_block_forward_nhwc(x_nhwc, params, *, kh=3, kw=3, pad=1,
                            out_dtype=jnp.bfloat16):
    """NHWC in, NHWC out (bf16 by default so a following layer can consume it
    without an extra cast / HBM round trip)."""
    w = params["conv_w"]            # (Cout, Cin, KH, KW)  -- PyTorch layout
    b = params["conv_b"]            # (Cout,)
    gamma = params["bn_gamma"]      # (Cout,)
    beta = params["bn_beta"]        # (Cout,)
    rmean = params["bn_mean"]       # (Cout,)
    rvar = params["bn_var"]         # (Cout,)
    eps = 1e-5

    N, H, W, Cin = x_nhwc.shape
    Cout = w.shape[0]
    Ho = H + 2 * pad - kh + 1       # TODO(synk): stride != 1 not implemented.
    Wo = W + 2 * pad - kw + 1
    Wp = W + 2 * pad

    # --- tile choice: VMEM-aware cap, prefer divisors of Ho, >= 4 grid steps ---
    out_bytes = jnp.dtype(out_dtype).itemsize
    bytes_per_row = 2 * (2 * Wp * Cin * 2) + 2 * (Wo * Cout * out_bytes)
    max_rows = max(kh - 1, 1, min(128, (8 << 20) // max(bytes_per_row, 1)))
    tile_h = _choose_tile_h(Ho, N, kh, max_rows=max_rows)
    T = -(-Ho // tile_h)
    Hp_ext = (T + 1) * tile_h       # halo block index t+1 must stay in bounds

    # --- XLA-side prep: a single zero-pad of the bf16 activations (no im2col) ---
    xp = jnp.pad(x_nhwc.astype(jnp.bfloat16),
                 ((0, 0), (pad, Hp_ext - H - pad), (pad, pad), (0, 0)))

    # --- fold BN (eval mode) into weights / bias (conv-BN fold, bias kept f32) ---
    scale = gamma * jax.lax.rsqrt(rvar + eps)                       # (Cout,)
    w_f = (jnp.transpose(w, (2, 3, 1, 0)) * scale).astype(jnp.bfloat16)
    bias = ((b - rmean) * scale + beta).astype(jnp.float32).reshape(1, Cout)

    cost = pl.CostEstimate(
        flops=2 * N * T * tile_h * Wo * kh * kw * Cin * Cout,
        transcendentals=0,
        bytes_accessed=(2 * N * T * tile_h * Wp * Cin * 2          # xa + xb reads
                        + kh * kw * Cin * Cout * 2 + Cout * 4      # resident w / bias
                        + N * T * tile_h * Wo * Cout * out_bytes), # bf16 writeback
    )

    out = pl.pallas_call(
        _conv_bn_relu_kernel,
        out_shape=jax.ShapeDtypeStruct((N, T * tile_h, Wo, Cout), out_dtype),
        grid=(N, T),
        in_specs=[
            # Current row block and its +1 neighbour (halo).  Last two block
            # dims (Wp, Cin) are full-extent, so no lane padding is needed.
            pl.BlockSpec((None, tile_h, Wp, Cin), lambda n, t: (n, t, 0, 0)),
            pl.BlockSpec((None, tile_h, Wp, Cin), lambda n, t: (n, t + 1, 0, 0)),
            # Weight / bias: constant index maps -> DMA'd once, VMEM resident.
            pl.BlockSpec((kh, kw, Cin, Cout), lambda n, t: (0, 0, 0, 0)),
            pl.BlockSpec((1, Cout), lambda n, t: (0, 0)),
        ],
        out_specs=pl.BlockSpec((None, tile_h, Wo, Cout), lambda n, t: (n, t, 0, 0)),
        compiler_params=pltpu.CompilerParams(
            dimension_semantics=("parallel", "parallel"),
            vmem_limit_bytes=32 * 1024 * 1024,
        ),
        cost_estimate=cost,
    )(xp, xp, w_f, bias)

    if T * tile_h != Ho:
        out = out[:, :Ho]
    return out


def conv_block_forward(x_nchw, params, *, kh=3, kw=3, pad=1):
    """NCHW wrapper matching the PyTorch module convention (f32 output).
    Prefer the NHWC entry point when composing layers to skip the transposes
    and keep the bf16 activation layout."""
    x = jnp.transpose(x_nchw, (0, 2, 3, 1))
    y = conv_block_forward_nhwc(x, params, kh=kh, kw=kw, pad=pad)
    return jnp.transpose(y, (0, 3, 1, 2)).astype(jnp.float32)


# ----------------------------------------------------------------------------
# Pure-JAX reference (f32, same math) for a sanity check.
# ----------------------------------------------------------------------------
def _reference(x_nchw, params, *, pad=1):
    w, b = params["conv_w"], params["conv_b"]
    gamma, beta = params["bn_gamma"], params["bn_beta"]
    rmean, rvar = params["bn_mean"], params["bn_var"]
    eps = 1e-5
    y = jax.lax.conv_general_dilated(
        x_nchw, w, window_strides=(1, 1), padding=[(pad, pad), (pad, pad)],
        dimension_numbers=("NCHW", "OIHW", "NCHW"),
        precision=jax.lax.Precision.HIGHEST)
    y = y + b[None, :, None, None]
    y = (y - rmean[None, :, None, None]) / jnp.sqrt(rvar[None, :, None, None] + eps)
    y = y * gamma[None, :, None, None] + beta[None, :, None, None]
    return jnp.maximum(y, 0.0)


if __name__ == "__main__":
    # Shapes implied by the module: conv_block(in_channels=4, out_channels=8,
    # kernel_size=3, padding=1) on a small NCHW batch.
    N, Cin, H, W = 2, 4, 16, 16
    Cout, KH, KW = 8, 3, 3

    key = jax.random.PRNGKey(0)
    k_x, k_w, k_b, k_g, k_be, k_m, k_v = jax.random.split(key, 7)

    x = jax.random.normal(k_x, (N, Cin, H, W), dtype=jnp.float32)

    params = {
        "conv_w":   0.1 * jax.random.normal(k_w, (Cout, Cin, KH, KW), dtype=jnp.float32),
        "conv_b":   0.1 * jax.random.normal(k_b, (Cout,), dtype=jnp.float32),
        "bn_gamma": 1.0 + 0.1 * jax.random.normal(k_g, (Cout,), dtype=jnp.float32),
        "bn_beta":  0.1 * jax.random.normal(k_be, (Cout,), dtype=jnp.float32),
        "bn_mean":  0.1 * jax.random.normal(k_m, (Cout,), dtype=jnp.float32),
        "bn_var":   jnp.abs(jax.random.normal(k_v, (Cout,), dtype=jnp.float32)) + 0.5,
    }

    fwd = jax.jit(functools.partial(conv_block_forward, kh=KH, kw=KW, pad=1))
    out = fwd(x, params)
    jax.block_until_ready(out)

    ref = _reference(x, params, pad=1)
    assert out.shape == (N, Cout, H, W), out.shape
    # bf16 MXU inputs + bf16 output store (f32 accumulation) -> relaxed tolerance.
    max_err = float(jnp.max(jnp.abs(out - ref)))
    assert max_err < 7.5e-2, max_err

    print("KERNEL_OK")
</pallas_src>

<mosaic_0001>
module attributes {stable_mosaic.version = 11 : i64} {
  func.func @_conv_bn_relu_kernel(%arg0: i32, %arg1: i32, %arg2: memref<1x8x18x4xbf16, #tpu.memory_space<vmem>>, %arg3: memref<1x8x18x4xbf16, #tpu.memory_space<vmem>>, %arg4: memref<3x3x4x8xbf16, #tpu.memory_space<vmem>>, %arg5: memref<1x8xf32, #tpu.memory_space<vmem>>, %arg6: memref<1x8x16x8xbf16, #tpu.memory_space<vmem>>) attributes {dimension_semantics = [#tpu.dimension_semantics<parallel>, #tpu.dimension_semantics<parallel>], iteration_bounds = array<i64: 2, 2>, scalar_prefetch = 0 : i64, scratch_operands = 0 : i64, tpu.core_type = #tpu.core_type<tc>, window_params = [{transform_indices = @transform_0, window_bounds = array<i64: 1, 8, 18, 4>}, {transform_indices = @transform_1, window_bounds = array<i64: 1, 8, 18, 4>}, {pipeline_mode = #tpu.pipeline_mode<synchronous>, transform_indices = @transform_2, window_bounds = array<i64: 3, 3, 4, 8>}, {pipeline_mode = #tpu.pipeline_mode<synchronous>, transform_indices = @transform_3, window_bounds = array<i64: 1, 8>}, {transform_indices = @transform_4, window_bounds = array<i64: 1, 8, 16, 8>}]} {
    %c0 = arith.constant 0 : index
    %c0_0 = arith.constant 0 : index
    %c0_1 = arith.constant 0 : index
    %c0_2 = arith.constant 0 : index
    %0 = vector.load %arg2[%c0, %c0_0, %c0_1, %c0_2] : memref<1x8x18x4xbf16, #tpu.memory_space<vmem>>, vector<1x8x18x4xbf16>
    %1 = vector.shape_cast %0 : vector<1x8x18x4xbf16> to vector<8x18x4xbf16>
    %c0_3 = arith.constant 0 : index
    %c0_4 = arith.constant 0 : index
    %c0_5 = arith.constant 0 : index
    %c0_6 = arith.constant 0 : index
    %2 = vector.load %arg3[%c0_3, %c0_4, %c0_5, %c0_6] : memref<1x8x18x4xbf16, #tpu.memory_space<vmem>>, vector<1x8x18x4xbf16>
    %3 = vector.shape_cast %2 : vector<1x8x18x4xbf16> to vector<8x18x4xbf16>
    %4 = tpu.concatenate %1, %3 in 0 : vector<8x18x4xbf16>, vector<8x18x4xbf16> -> vector<16x18x4xbf16>
    %c0_7 = arith.constant 0 : index
    %c0_8 = arith.constant 0 : index
    %c0_9 = arith.constant 0 : index
    %c0_10 = arith.constant 0 : index
    %5 = vector.load %arg4[%c0_7, %c0_8, %c0_9, %c0_10] : memref<3x3x4x8xbf16, #tpu.memory_space<vmem>>, vector<3x3x4x8xbf16>
    %cst = arith.constant 0.000000e+00 : f32
    %6 = vector.broadcast %cst : f32 to vector<128x8xf32>
    %7 = vector.extract_strided_slice %4 {offsets = [0, 0, 0], sizes = [8, 16, 4], strides = [1, 1, 1]} : vector<16x18x4xbf16> to vector<8x16x4xbf16>
    %8 = vector.shape_cast %7 : vector<8x16x4xbf16> to vector<128x4xbf16>
    %9 = vector.extract_strided_slice %5 {offsets = [0, 0, 0, 0], sizes = [1, 1, 4, 8], strides = [1, 1, 1, 1]} : vector<3x3x4x8xbf16> to vector<1x1x4x8xbf16>
    %10 = vector.shape_cast %9 : vector<1x1x4x8xbf16> to vector<4x8xbf16>
    %cst_11 = arith.constant dense<0.000000e+00> : vector<128x8xf32>
    %11 = tpu.matmul %8, %10, %cst_11 {dimension_numbers = #tpu.dot_dimension_numbers<[1], [0], [0], [1], [0, 0, 1, 1], [], []>} : vector<128x4xbf16>, vector<4x8xbf16>, vector<128x8xf32> -> vector<128x8xf32>
    %12 = arith.addf %6, %11 : vector<128x8xf32>
    %13 = vector.extract_strided_slice %4 {offsets = [0, 1, 0], sizes = [8, 16, 4], strides = [1, 1, 1]} : vector<16x18x4xbf16> to vector<8x16x4xbf16>
    %14 = vector.shape_cast %13 : vector<8x16x4xbf16> to vector<128x4xbf16>
    %15 = vector.extract_strided_slice %5 {offsets = [0, 1, 0, 0], sizes = [1, 1, 4, 8], strides = [1, 1, 1, 1]} : vector<3x3x4x8xbf16> to vector<1x1x4x8xbf16>
    %16 = vector.shape_cast %15 : vector<1x1x4x8xbf16> to vector<4x8xbf16>
    %cst_12 = arith.constant dense<0.000000e+00> : vector<128x8xf32>
    %17 = tpu.matmul %14, %16, %cst_12 {dimension_numbers = #tpu.dot_dimension_numbers<[1], [0], [0], [1], [0, 0, 1, 1], [], []>} : vector<128x4xbf16>, vector<4x8xbf16>, vector<128x8xf32> -> vector<128x8xf32>
    %18 = arith.addf %12, %17 : vector<128x8xf32>
    %19 = vector.extract_strided_slice %4 {offsets = [0, 2, 0], sizes = [8, 16, 4], strides = [1, 1, 1]} : vector<16x18x4xbf16> to vector<8x16x4xbf16>
    %20 = vector.shape_cast %19 : vector<8x16x4xbf16> to vector<128x4xbf16>
    %21 = vector.extract_strided_slice %5 {offsets = [0, 2, 0, 0], sizes = [1, 1, 4, 8], strides = [1, 1, 1, 1]} : vector<3x3x4x8xbf16> to vector<1x1x4x8xbf16>
    %22 = vector.shape_cast %21 : vector<1x1x4x8xbf16> to vector<4x8xbf16>
    %cst_13 = arith.constant dense<0.000000e+00> : vector<128x8xf32>
    %23 = tpu.matmul %20, %22, %cst_13 {dimension_numbers = #tpu.dot_dimension_numbers<[1], [0], [0], [1], [0, 0, 1, 1], [], []>} : vector<128x4xbf16>, vector<4x8xbf16>, vector<128x8xf32> -> vector<128x8xf32>
    %24 = arith.addf %18, %23 : vector<128x8xf32>
    %25 = vector.extract_strided_slice %4 {offsets = [1, 0, 0], sizes = [8, 16, 4], strides = [1, 1, 1]} : vector<16x18x4xbf16> to vector<8x16x4xbf16>
    %26 = vector.shape_cast %25 : vector<8x16x4xbf16> to vector<128x4xbf16>
    %27 = vector.extract_strided_slice %5 {offsets = [1, 0, 0, 0], sizes = [1, 1, 4, 8], strides = [1, 1, 1, 1]} : vector<3x3x4x8xbf16> to vector<1x1x4x8xbf16>
    %28 = vector.shape_cast %27 : vector<1x1x4x8xbf16> to vector<4x8xbf16>
    %cst_14 = arith.constant dense<0.000000e+00> : vector<128x8xf32>
    %29 = tpu.matmul %26, %28, %cst_14 {dimension_numbers = #tpu.dot_dimension_numbers<[1], [0], [0], [1], [0, 0, 1, 1], [], []>} : vector<128x4xbf16>, vector<4x8xbf16>, vector<128x8xf32> -> vector<128x8xf32>
    %30 = arith.addf %24, %29 : vector<128x8xf32>
    %31 = vector.extract_strided_slice %4 {offsets = [1, 1, 0], sizes = [8, 16, 4], strides = [1, 1, 1]} : vector<16x18x4xbf16> to vector<8x16x4xbf16>
    %32 = vector.shape_cast %31 : vector<8x16x4xbf16> to vector<128x4xbf16>
    %33 = vector.extract_strided_slice %5 {offsets = [1, 1, 0, 0], sizes = [1, 1, 4, 8], strides = [1, 1, 1, 1]} : vector<3x3x4x8xbf16> to vector<1x1x4x8xbf16>
    %34 = vector.shape_cast %33 : vector<1x1x4x8xbf16> to vector<4x8xbf16>
    %cst_15 = arith.constant dense<0.000000e+00> : vector<128x8xf32>
    %35 = tpu.matmul %32, %34, %cst_15 {dimension_numbers = #tpu.dot_dimension_numbers<[1], [0], [0], [1], [0, 0, 1, 1], [], []>} : vector<128x4xbf16>, vector<4x8xbf16>, vector<128x8xf32> -> vector<128x8xf32>
    %36 = arith.addf %30, %35 : vector<128x8xf32>
    %37 = vector.extract_strided_slice %4 {offsets = [1, 2, 0], sizes = [8, 16, 4], strides = [1, 1, 1]} : vector<16x18x4xbf16> to vector<8x16x4xbf16>
    %38 = vector.shape_cast %37 : vector<8x16x4xbf16> to vector<128x4xbf16>
    %39 = vector.extract_strided_slice %5 {offsets = [1, 2, 0, 0], sizes = [1, 1, 4, 8], strides = [1, 1, 1, 1]} : vector<3x3x4x8xbf16> to vector<1x1x4x8xbf16>
    %40 = vector.shape_cast %39 : vector<1x1x4x8xbf16> to vector<4x8xbf16>
    %cst_16 = arith.constant dense<0.000000e+00> : vector<128x8xf32>
    %41 = tpu.matmul %38, %40, %cst_16 {dimension_numbers = #tpu.dot_dimension_numbers<[1], [0], [0], [1], [0, 0, 1, 1], [], []>} : vector<128x4xbf16>, vector<4x8xbf16>, vector<128x8xf32> -> vector<128x8xf32>
    %42 = arith.addf %36, %41 : vector<128x8xf32>
    %43 = vector.extract_strided_slice %4 {offsets = [2, 0, 0], sizes = [8, 16, 4], strides = [1, 1, 1]} : vector<16x18x4xbf16> to vector<8x16x4xbf16>
    %44 = vector.shape_cast %43 : vector<8x16x4xbf16> to vector<128x4xbf16>
    %45 = vector.extract_strided_slice %5 {offsets = [2, 0, 0, 0], sizes = [1, 1, 4, 8], strides = [1, 1, 1, 1]} : vector<3x3x4x8xbf16> to vector<1x1x4x8xbf16>
    %46 = vector.shape_cast %45 : vector<1x1x4x8xbf16> to vector<4x8xbf16>
    %cst_17 = arith.constant dense<0.000000e+00> : vector<128x8xf32>
    %47 = tpu.matmul %44, %46, %cst_17 {dimension_numbers = #tpu.dot_dimension_numbers<[1], [0], [0], [1], [0, 0, 1, 1], [], []>} : vector<128x4xbf16>, vector<4x8xbf16>, vector<128x8xf32> -> vector<128x8xf32>
    %48 = arith.addf %42, %47 : vector<128x8xf32>
    %49 = vector.extract_strided_slice %4 {offsets = [2, 1, 0], sizes = [8, 16, 4], strides = [1, 1, 1]} : vector<16x18x4xbf16> to vector<8x16x4xbf16>
    %50 = vector.shape_cast %49 : vector<8x16x4xbf16> to vector<128x4xbf16>
    %51 = vector.extract_strided_slice %5 {offsets = [2, 1, 0, 0], sizes = [1, 1, 4, 8], strides = [1, 1, 1, 1]} : vector<3x3x4x8xbf16> to vector<1x1x4x8xbf16>
    %52 = vector.shape_cast %51 : vector<1x1x4x8xbf16> to vector<4x8xbf16>
    %cst_18 = arith.constant dense<0.000000e+00> : vector<128x8xf32>
    %53 = tpu.matmul %50, %52, %cst_18 {dimension_numbers = #tpu.dot_dimension_numbers<[1], [0], [0], [1], [0, 0, 1, 1], [], []>} : vector<128x4xbf16>, vector<4x8xbf16>, vector<128x8xf32> -> vector<128x8xf32>
    %54 = arith.addf %48, %53 : vector<128x8xf32>
    %55 = vector.extract_strided_slice %4 {offsets = [2, 2, 0], sizes = [8, 16, 4], strides = [1, 1, 1]} : vector<16x18x4xbf16> to vector<8x16x4xbf16>
    %56 = vector.shape_cast %55 : vector<8x16x4xbf16> to vector<128x4xbf16>
    %57 = vector.extract_strided_slice %5 {offsets = [2, 2, 0, 0], sizes = [1, 1, 4, 8], strides = [1, 1, 1, 1]} : vector<3x3x4x8xbf16> to vector<1x1x4x8xbf16>
    %58 = vector.shape_cast %57 : vector<1x1x4x8xbf16> to vector<4x8xbf16>
    %cst_19 = arith.constant dense<0.000000e+00> : vector<128x8xf32>
    %59 = tpu.matmul %56, %58, %cst_19 {dimension_numbers = #tpu.dot_dimension_numbers<[1], [0], [0], [1], [0, 0, 1, 1], [], []>} : vector<128x4xbf16>, vector<4x8xbf16>, vector<128x8xf32> -> vector<128x8xf32>
    %60 = arith.addf %54, %59 : vector<128x8xf32>
    %c0_20 = arith.constant 0 : index
    %c0_21 = arith.constant 0 : index
    %61 = vector.load %arg5[%c0_20, %c0_21] : memref<1x8xf32, #tpu.memory_space<vmem>>, vector<1x8xf32>
    %62 = vector.broadcast %61 : vector<1x8xf32> to vector<128x8xf32>
    %63 = arith.addf %60, %62 : vector<128x8xf32>
    %cst_22 = arith.constant 0.000000e+00 : f32
    %64 = vector.broadcast %cst_22 : f32 to vector<128x8xf32>
    %65 = arith.maximumf %63, %64 : vector<128x8xf32>
    %66 = vector.shape_cast %65 : vector<128x8xf32> to vector<8x16x8xf32>
    %67 = arith.truncf %66 : vector<8x16x8xf32> to vector<8x16x8xbf16>
    %c0_23 = arith.constant 0 : index
    %c0_24 = arith.constant 0 : index
    %c0_25 = arith.constant 0 : index
    %c0_26 = arith.constant 0 : index
    %68 = vector.load %arg6[%c0_23, %c0_24, %c0_25, %c0_26] : memref<1x8x16x8xbf16, #tpu.memory_space<vmem>>, vector<1x8x16x8xbf16>
    %69 = vector.shape_cast %68 : vector<1x8x16x8xbf16> to vector<8x16x8xbf16>
    %70 = vector.shape_cast %67 : vector<8x16x8xbf16> to vector<1x8x16x8xbf16>
    tpu.vector_store %arg6[%c0_23, %c0_24, %c0_25, %c0_26], %70 {strides = array<i32>} : memref<1x8x16x8xbf16, #tpu.memory_space<vmem>>, vector<1x8x16x8xbf16>,
    return
  }
  func.func @transform_0(%arg0: i32, %arg1: i32) -> (i32, i32, i32, i32) {
    %c0_i32 = arith.constant 0 : i32
    %c0_i32_0 = arith.constant 0 : i32
    %c0_i32_1 = arith.constant 0 : i32
    return %arg0, %arg1, %c0_i32, %c0_i32_0 : i32, i32, i32, i32
  }
  func.func @transform_1(%arg0: i32, %arg1: i32) -> (i32, i32, i32, i32) {
    %c1_i32 = arith.constant 1 : i32
    %0 = arith.addi %arg1, %c1_i32 : i32
    %c0_i32 = arith.constant 0 : i32
    %c0_i32_0 = arith.constant 0 : i32
    %c0_i32_1 = arith.constant 0 : i32
    return %arg0, %0, %c0_i32, %c0_i32_0 : i32, i32, i32, i32
  }
  func.func @transform_2(%arg0: i32, %arg1: i32) -> (i32, i32, i32, i32) {
    %c0_i32 = arith.constant 0 : i32
    %c0_i32_0 = arith.constant 0 : i32
    %c0_i32_1 = arith.constant 0 : i32
    %c0_i32_2 = arith.constant 0 : i32
    %c0_i32_3 = arith.constant 0 : i32
    return %c0_i32, %c0_i32_0, %c0_i32_1, %c0_i32_2 : i32, i32, i32, i32
  }
  func.func @transform_3(%arg0: i32, %arg1: i32) -> (i32, i32) {
    %c0_i32 = arith.constant 0 : i32
    %c0_i32_0 = arith.constant 0 : i32
    %c0_i32_1 = arith.constant 0 : i32
    return %c0_i32, %c0_i32_0 : i32, i32
  }
  func.func @transform_4(%arg0: i32, %arg1: i32) -> (i32, i32, i32, i32) {
    %c0_i32 = arith.constant 0 : i32
    %c0_i32_0 = arith.constant 0 : i32
    %c0_i32_1 = arith.constant 0 : i32
    return %arg0, %arg1, %c0_i32, %c0_i32_0 : i32, i32, i32, i32
  }
}

</mosaic_0001>

<llo_original>
// kernel: conv_block_forward.1
$region0: #{conv_block_forward.1}
  #allocation0 [shape = 'u32[]', space=smem, size = 0x4, offset = 0x4, fixed_abs, tag = 'smem constant byte address 0x4 - core index']
  #allocation1 [shape = 'u32[72,128]{1,0:T(1,128)}', space=vmem, size = 0x9000, scoped, tag = 'internal scratch']
  %s0 = inlined_call_operand.vmem [shape: bf16[2,24,18,4], index: 0, kind: input, shape index: {}, may-alias: {0,1}]
  %s1 = inlined_call_operand.vmem [shape: bf16[2,24,18,4], index: 1, kind: input, shape index: {}, may-alias: {0,1}]
  %s2 = inlined_call_operand.vmem [shape: bf16[3,3,4,8], index: 2, kind: input, shape index: {}]
  %s3 = inlined_call_operand.vmem [shape: f32[1,8], index: 3, kind: input, shape index: {}]
  %s4 = inlined_call_operand.vmem [shape: bf16[2,16,16,8], index: 4, kind: output, shape index: {}]
  %s5 = sld [smem:[#allocation0]]
  $region49: #{conv_block_forward.1} parent=0
    _
  %s7 = ssub.s32 1, %s5
  %s8 = scalar_select 0, %s7, %s5
  loop: start=0, step=1, limit=6
  $region2: #{conv_block_forward.1} parent=0 // loop_pre_header
    _
  $region3: #{conv_block_forward.1} parent=0 // loop_header
    %s10 = sphi 0, %s14
    %p11 = scmp.ge.s32.totalorder %s10, 6
    %s17 = sphi 0, %s29
    %s18 = sphi 0, %s25
    %s19 = sphi 0, %s17
    %s20 = sphi 0, %s18
    %s21 = sphi 0, %s19
    %s22 = sphi 0, %s20
    %s34 = sphi 0, %s36
    %s37 = sphi 0, %s34
    %s38 = sphi 0, %s37
    %s54 = sphi 0, %s38
    %s64 = sphi 0, %s66
    %s67 = sphi 0, %s64
    %s68 = sphi 0, %s67
    %s84 = sphi 0, %s68
    %s88 = sphi 0, %s88
    %s90 = sphi 0, %s88
    %s91 = sphi 0, %s90
    %s105 = sphi 0, %s91
    %s109 = sphi 0, %s109
    %s111 = sphi 0, %s109
    %s112 = sphi 0, %s111
    %s126 = sphi 0, %s112
    %s134 = sphi 0, %s136
    %s137 = sphi 0, %s134
    %s138 = sphi 0, %s137
    %s154 = sphi 0, %s138
  $region4: #{conv_block_forward.1} parent=0 // loop_header_branch
    %13 = sbr.rel (%p11) target = $region8
  $region5: #{conv_block_forward.1} parent=0 // loop_body
    %s15 = ssub.s32 %s10, 1
    %s16 = ssub.s32 %s10, 2
    %s23 = sadd.s32 1, %s18
    %p24 = scmp.ge.s32.totalorder %s23, 2
    %s25 = scalar_select %p24, 0, %s23
    %s26 = sadd.s32 1, %s17
    %s27 = scalar_select %p24, %s26, %s17
    %p28 = scmp.ge.s32.totalorder %s27, 2
    %s29 = scalar_select %p28, 0, %s27
    %s30 = ssub.s32 %s17, %s29
    %s31 = ssub.s32 %s18, %s25
    %s32 = sor.u32 %s30, %s31
    %p33 = scmp.eq.s32.totalorder %s32, 0
    %s35 = sadd.s32 %s34, 1
    %s36 = scalar_select %p33, %s34, %s35
    %p39 = pneg %p33
    %p40 = scmp.eq.s32.totalorder %s10, 3
    %p41 = por %p39, %p40
    %p42 = scmp.ne.s32.totalorder %s34, %s37
    %p43 = scmp.eq.s32.totalorder %s10, 0
    %p44 = por %p42, %p43
    %p45 = scmp.ne.s32.totalorder %s34, %s37
    %p46 = scmp.eq.s32.totalorder %s15, 3
    %p47 = por %p45, %p46
    %p48 = scmp.ne.s32.totalorder %s37, %s38
    %p49 = scmp.eq.s32.totalorder %s15, 0
    %p50 = por %p48, %p49
    %p51 = scmp.ne.s32.totalorder %s37, %s38
    %p52 = scmp.eq.s32.totalorder %s16, 3
    %p53 = por %p51, %p52
    %p55 = scmp.ne.s32.totalorder %s38, %s54
    %p56 = scmp.eq.s32.totalorder %s16, 0
    %p57 = por %p55, %p56
    %s58 = sadd.s32 %s18, 1
    %s59 = sadd.s32 %s25, 1
    %s60 = ssub.s32 %s17, %s29
    %s61 = ssub.s32 %s58, %s59
    %s62 = sor.u32 %s60, %s61
    %p63 = scmp.eq.s32.totalorder %s62, 0
    %s65 = sadd.s32 %s64, 1
    %s66 = scalar_select %p63, %s64, %s65
    %p69 = pneg %p63
    %p70 = scmp.eq.s32.totalorder %s10, 3
    %p71 = por %p69, %p70
    %p72 = scmp.ne.s32.totalorder %s64, %s67
    %p73 = scmp.eq.s32.totalorder %s10, 0
    %p74 = por %p72, %p73
    %p75 = scmp.ne.s32.totalorder %s64, %s67
    %p76 = scmp.eq.s32.totalorder %s15, 3
    %p77 = por %p75, %p76
    %p78 = scmp.ne.s32.totalorder %s67, %s68
    %p79 = scmp.eq.s32.totalorder %s15, 0
    %p80 = por %p78, %p79
    %p81 = scmp.ne.s32.totalorder %s67, %s68
    %p82 = scmp.eq.s32.totalorder %s16, 3
    %p83 = por %p81, %p82
    %p85 = scmp.ne.s32.totalorder %s68, %s84
    %p86 = scmp.eq.s32.totalorder %s16, 0
    %p87 = por %p85, %p86
    %s89 = sadd.s32 %s88, 1
    %p92 = scmp.eq.s32.totalorder %s10, 3
    %p93 = scmp.ne.s32.totalorder %s88, %s90
    %p94 = scmp.eq.s32.totalorder %s10, 0
    %p95 = por %p93, %p94
    %p96 = scmp.ne.s32.totalorder %s88, %s90
    %p97 = scmp.eq.s32.totalorder %s15, 3
    %p98 = por %p96, %p97
    %p99 = scmp.ne.s32.totalorder %s90, %s91
    %p100 = scmp.eq.s32.totalorder %s15, 0
    %p101 = por %p99, %p100
    %p102 = scmp.ne.s32.totalorder %s90, %s91
    %p103 = scmp.eq.s32.totalorder %s16, 3
    %p104 = por %p102, %p103
    %p106 = scmp.ne.s32.totalorder %s91, %s105
    %p107 = scmp.eq.s32.totalorder %s16, 0
    %p108 = por %p106, %p107
    %s110 = sadd.s32 %s109, 1
    %p113 = scmp.eq.s32.totalorder %s10, 3
    %p114 = scmp.ne.s32.totalorder %s109, %s111
    %p115 = scmp.eq.s32.totalorder %s10, 0
    %p116 = por %p114, %p115
    %p117 = scmp.ne.s32.totalorder %s109, %s111
    %p118 = scmp.eq.s32.totalorder %s15, 3
    %p119 = por %p117, %p118
    %p120 = scmp.ne.s32.totalorder %s111, %s112
    %p121 = scmp.eq.s32.totalorder %s15, 0
    %p122 = por %p120, %p121
    %p123 = scmp.ne.s32.totalorder %s111, %s112
    %p124 = scmp.eq.s32.totalorder %s16, 3
    %p125 = por %p123, %p124
    %p127 = scmp.ne.s32.totalorder %s112, %s126
    %p128 = scmp.eq.s32.totalorder %s16, 0
    %p129 = por %p127, %p128
    %s130 = ssub.s32 %s17, %s29
    %s131 = ssub.s32 %s18, %s25
    %s132 = sor.u32 %s130, %s131
    %p133 = scmp.eq.s32.totalorder %s132, 0
    %s135 = sadd.s32 %s134, 1
    %s136 = scalar_select %p133, %s134, %s135
    %p139 = pneg %p133
    %p140 = scmp.eq.s32.totalorder %s10, 3
    %p141 = por %p139, %p140
    %p142 = scmp.ne.s32.totalorder %s134, %s137
    %p143 = scmp.eq.s32.totalorder %s10, 0
    %p144 = por %p142, %p143
    %p145 = scmp.ne.s32.totalorder %s134, %s137
    %p146 = scmp.eq.s32.totalorder %s15, 3
    %p147 = por %p145, %p146
    %p148 = scmp.ne.s32.totalorder %s137, %s138
    %p149 = scmp.eq.s32.totalorder %s15, 0
    %p150 = por %p148, %p149
    %p151 = scmp.ne.s32.totalorder %s137, %s138
    %p152 = scmp.eq.s32.totalorder %s16, 3
    %p153 = por %p151, %p152
    %p155 = scmp.ne.s32.totalorder %s138, %s154
    %p156 = scmp.eq.s32.totalorder %s16, 0
    %p157 = por %p155, %p156
    %p158 = scmp.le.s32.totalorder 1, %s10
    %p159 = scmp.lt.s32.totalorder %s10, 5
    %p160 = pnand %p158, %p159
    %p161 = pneg %p160
    // Predicated region
    $region9: #{conv_block_forward.1} parent=5 // pred_check
      _
    $region10: #{conv_block_forward.1} parent=5 // pred_check_branch
      %163 = sbr.rel (%p160) target = $region12
    $region11: #{conv_block_forward.1} parent=5 // pred_region
      %s164 = ssub.s32 %s10, 1
      // Predicated region
      $region13: #{conv_block_forward.1} parent=11 // pred_check
        %p165 = pneg %p101
      $region14: #{conv_block_forward.1} parent=11 // pred_check_branch
        %167 = sbr.rel (%p165) target = $region16
      $region15: #{conv_block_forward.1} parent=11 // pred_region
        _
      $region16: #{conv_block_forward.1} parent=11 // pred_fallthru
        _
      // Predicated region
      $region17: #{conv_block_forward.1} parent=11 // pred_check
        %p168 = pneg %p122
      $region18: #{conv_block_forward.1} parent=11 // pred_check_branch
        %170 = sbr.rel (%p168) target = $region20
      $region19: #{conv_block_forward.1} parent=11 // pred_region
        _
      $region20: #{conv_block_forward.1} parent=11 // pred_fallthru
        _
    $region12: #{conv_block_forward.1} parent=5 // pred_fallthru
      _
    %p171 = scmp.lt.s32.totalorder %s10, 4
    // Predicated region
    $region21: #{conv_block_forward.1} parent=5 // pred_check
      %p172 = pneg %p171
    $region22: #{conv_block_forward.1} parent=5 // pred_check_branch
      %174 = sbr.rel (%p172) target = $region24
    $region23: #{conv_block_forward.1} parent=5 // pred_region
      // Predicated region
      $region25: #{conv_block_forward.1} parent=23 // pred_check
        %p175 = pneg %p44
      $region26: #{conv_block_forward.1} parent=23 // pred_check_branch
        %177 = sbr.rel (%p175) target = $region28
      $region27: #{conv_block_forward.1} parent=23 // pred_region
        %s178 = smul.u32 8, %s18
        %p179 = scmp.lt.s32.totalorder %s17, 1
        %s180 = scalar_select %p179, %s17, 1
        %p181 = scmp.lt.s32.totalorder %s178, 23
        %s182 = scalar_select %p181, %s178, 23
        %s183 = smul.addr %s182, 3
        %s184 = smul.addr %s180, 72
        %s185 = sadd.s32 %s183, %s184
        %s186 = smul.addr %s185, 4
        %s187 = scalar_lea.vmem %s0, %s186
        %s188 = smul.u32 8, %s18
      $region28: #{conv_block_forward.1} parent=23 // pred_fallthru
        _
      // Predicated region
      $region29: #{conv_block_forward.1} parent=23 // pred_check
        %p189 = pneg %p74
      $region30: #{conv_block_forward.1} parent=23 // pred_check_branch
        %191 = sbr.rel (%p189) target = $region32
      $region31: #{conv_block_forward.1} parent=23 // pred_region
        %s192 = sadd.s32 %s18, 1
        %s193 = smul.u32 8, %s192
        %p194 = scmp.lt.s32.totalorder %s17, 1
        %s195 = scalar_select %p194, %s17, 1
        %p196 = scmp.lt.s32.totalorder %s193, 23
        %s197 = scalar_select %p196, %s193, 23
        %s198 = smul.addr %s197, 3
        %s199 = smul.addr %s195, 72
        %s200 = sadd.s32 %s198, %s199
        %s201 = smul.addr %s200, 4
        %s202 = scalar_lea.vmem %s1, %s201
        %s203 = sadd.s32 %s18, 1
        %s204 = smul.u32 8, %s203
      $region32: #{conv_block_forward.1} parent=23 // pred_fallthru
        _
    $region24: #{conv_block_forward.1} parent=5 // pred_fallthru
      _
    %p205 = scmp.le.s32.totalorder 1, %s10
    %p206 = scmp.lt.s32.totalorder %s10, 5
    %p207 = pnand %p205, %p206
    %p208 = pneg %p207
    // Predicated region
    $region33: #{conv_block_forward.1} parent=5 // pred_check
      _
    $region34: #{conv_block_forward.1} parent=5 // pred_check_branch
      %210 = sbr.rel (%p207) target = $region36
    $region35: #{conv_block_forward.1} parent=5 // pred_region
      %s211 = ssub.s32 %s10, 1
      %s212 = smul.u32 8, %s20
      %p213 = scmp.lt.s32.totalorder %s19, 1
      %s214 = scalar_select %p213, %s19, 1
      %p215 = scmp.lt.s32.totalorder %s212, 23
      %s216 = scalar_select %p215, %s212, 23
      %s217 = smul.addr %s216, 3
      %s218 = smul.addr %s214, 72
      %s219 = sadd.s32 %s217, %s218
      %s220 = smul.addr %s219, 4
      %s221 = scalar_lea.vmem %s0, %s220
      %p222 = pneg %p50
      %p223 = pneg %p47
      %s224 = sadd.s32 %s20, 1
      %s225 = smul.u32 8, %s224
      %p226 = scmp.lt.s32.totalorder %s19, 1
      %s227 = scalar_select %p226, %s19, 1
      %p228 = scmp.lt.s32.totalorder %s225, 23
      %s229 = scalar_select %p228, %s225, 23
      %s230 = smul.addr %s229, 3
      %s231 = smul.addr %s227, 72
      %s232 = sadd.s32 %s230, %s231
      %s233 = smul.addr %s232, 4
      %s234 = scalar_lea.vmem %s1, %s233
      %p235 = pneg %p80
      %p236 = pneg %p77
      %p237 = pneg %p101
      %p238 = pneg %p98
      %p239 = pneg %p122
      %p240 = pneg %p119
      %p241 = pneg %p150
      %p242 = pneg %p147
      %s243 = smul.u32 8, %s20
      %p244 = scmp.lt.s32.totalorder %s19, 1
      %s245 = scalar_select %p244, %s19, 1
      %p246 = scmp.lt.s32.totalorder %s243, 15
      %s247 = scalar_select %p246, %s243, 15
      %s248 = smul.addr %s247, 2
      %s249 = smul.addr %s245, 32
      %s250 = sadd.s32 %s248, %s249
      %s251 = smul.addr %s250, 4
      %s252 = scalar_lea.vmem %s4, %s251
      %s253 = smul.u32 8, %s20
      %p254 = scmp.lt.s32.totalorder %s19, 1
      %s255 = scalar_select %p254, %s19, 1
      %p256 = scmp.lt.s32.totalorder %s253, 23
      %s257 = scalar_select %p256, %s253, 23
      %s258 = smul.addr %s257, 3
      %s259 = smul.addr %s255, 72
      %s260 = sadd.s32 %s258, %s259
      %s261 = smul.addr %s260, 4
      %s262 = scalar_lea.vmem %s0, %s261
      %s263 = smul.u32 8, %s20
      %s264 = sadd.s32 %s20, 1
      %s265 = smul.u32 8, %s264
      %p266 = scmp.lt.s32.totalorder %s19, 1
      %s267 = scalar_select %p266, %s19, 1
      %p268 = scmp.lt.s32.totalorder %s265, 23
      %s269 = scalar_select %p268, %s265, 23
      %s270 = smul.addr %s269, 3
      %s271 = smul.addr %s267, 72
      %s272 = sadd.s32 %s270, %s271
      %s273 = smul.addr %s272, 4
      %s274 = scalar_lea.vmem %s1, %s273
      %s275 = sadd.s32 %s20, 1
      %s276 = smul.u32 8, %s275
      %s277 = smul.u32 8, %s20
      %p278 = scmp.lt.s32.totalorder %s19, 1
      %s279 = scalar_select %p278, %s19, 1
      %p280 = scmp.lt.s32.totalorder %s277, 15
      %s281 = scalar_select %p280, %s277, 15
      %s282 = smul.addr %s281, 2
      %s283 = smul.addr %s279, 32
      %s284 = sadd.s32 %s282, %s283
      %s285 = smul.addr %s284, 4
      %s286 = scalar_lea.vmem %s4, %s285
      %s287 = smul.u32 8, %s20
      %v289 = vld [vmem:[%s262] sm:$0xf]
      %v290 = vld [vmem:[%s262 + $0x4] sm:$0xf]
      %v291 = vld [vmem:[%s262 + $0x8] sm:$0x1]
      %v292 = vld [vmem:[%s262 + $0xc] sm:$0xf]
      %v293 = vld [vmem:[%s262 + $0x10] sm:$0xf]
      %v294 = vld [vmem:[%s262 + $0x14] sm:$0x1]
      %v295 = vld [vmem:[%s262 + $0x18] sm:$0xf]
      %v296 = vld [vmem:[%s262 + $0x1c] sm:$0xf]
      %v297 = vld [vmem:[%s262 + $0x20] sm:$0x1]
      %v298 = vld [vmem:[%s262 + $0x24] sm:$0xf]
      %v299 = vld [vmem:[%s262 + $0x28] sm:$0xf]
      %v300 = vld [vmem:[%s262 + $0x2c] sm:$0x1]
      %v301 = vld [vmem:[%s262 + $0x30] sm:$0xf]
      %v302 = vld [vmem:[%s262 + $0x34] sm:$0xf]
      %v303 = vld [vmem:[%s262 + $0x38] sm:$0x1]
      %v304 = vld [vmem:[%s262 + $0x3c] sm:$0xf]
      %v305 = vld [vmem:[%s262 + $0x40] sm:$0xf]
      %v306 = vld [vmem:[%s262 + $0x44] sm:$0x1]
      %v307 = vld [vmem:[%s262 + $0x48] sm:$0xf]
      %v308 = vld [vmem:[%s262 + $0x4c] sm:$0xf]
      %v309 = vld [vmem:[%s262 + $0x50] sm:$0x1]
      %v310 = vld [vmem:[%s262 + $0x54] sm:$0xf]
      %v311 = vld [vmem:[%s262 + $0x58] sm:$0xf]
      %v312 = vld [vmem:[%s262 + $0x5c] sm:$0x1]
      %v313 = vld [vmem:[%s274] sm:$0xf]
      %v314 = vld [vmem:[%s274 + $0x4] sm:$0xf]
      %v315 = vld [vmem:[%s274 + $0x8] sm:$0x1]
      %v316 = vld [vmem:[%s274 + $0xc] sm:$0xf]
      %v317 = vld [vmem:[%s274 + $0x10] sm:$0xf]
      %v318 = vld [vmem:[%s274 + $0x14] sm:$0x1]
      %v319 = vld [vmem:[%s2] sm:$0x3]
      %v320 = vld [vmem:[%s2 + $0x2] sm:$0x3]
      %v321 = vld [vmem:[%s2 + $0x4] sm:$0x3]
      %v322 = vld [vmem:[%s2 + $0x6] sm:$0x3]
      %v323 = vld [vmem:[%s2 + $0x8] sm:$0x3]
      %v324 = vld [vmem:[%s2 + $0xa] sm:$0x3]
      %v325 = vld [vmem:[%s2 + $0xc] sm:$0x3]
      %v326 = vld [vmem:[%s2 + $0xe] sm:$0x3]
      %v327 = vld [vmem:[%s2 + $0x10] sm:$0x3]
      %vm328 = vsmask.f32 3328
      %vm329 = vsmask.f32 7440
      %vm330 = vmor %vm328, %vm329
      %v332 = vshrl.u32 %v289, 16
      %v334 = vrot.slane %v332, 4
      %v335 = vshll.u32 %v289, 16
      %v337 = vrot.slane %v335, 5
      %v338 = vor.u32 %v334, %v337
      %v339 = vrot.slane %v338, 4
      %v341 = vshll.u32 %v290, 16
      %v343 = vrot.slane %v341, 5
      %v344 = vsel %vm330, %v339, %v343
      %v345 = vshrl.u32 %v290, 16
      %v347 = vrot.slane %v345, 4
      %v348 = vor.u32 %v347, %v343
      %v349 = vrot.slane %v348, 4
      %v351 = vshll.u32 %v291, 16
      %v353 = vrot.slane %v351, 5
      %v354 = vsel %vm330, %v349, %v353
      %v356 = vshrl.u32 %v292, 16
      %v358 = vrot.slane %v356, 4
      %v359 = vshll.u32 %v292, 16
      %v361 = vrot.slane %v359, 5
      %v362 = vor.u32 %v358, %v361
      %v363 = vrot.slane %v362, 4
      %v365 = vshll.u32 %v293, 16
      %v367 = vrot.slane %v365, 5
      %v368 = vsel %vm330, %v363, %v367
      %v369 = vshrl.u32 %v293, 16
      %v371 = vrot.slane %v369, 4
      %v372 = vor.u32 %v371, %v367
      %v373 = vrot.slane %v372, 4
      %v375 = vshll.u32 %v294, 16
      %v377 = vrot.slane %v375, 5
      %v378 = vsel %vm330, %v373, %v377
      %v380 = vshrl.u32 %v295, 16
      %v382 = vrot.slane %v380, 4
      %v383 = vshll.u32 %v295, 16
      %v385 = vrot.slane %v383, 5
      %v386 = vor.u32 %v382, %v385
      %v387 = vrot.slane %v386, 4
      %v389 = vshll.u32 %v296, 16
      %v391 = vrot.slane %v389, 5
      %v392 = vsel %vm330, %v387, %v391
      %v393 = vshrl.u32 %v296, 16
      %v395 = vrot.slane %v393, 4
      %v396 = vor.u32 %v395, %v391
      %v397 = vrot.slane %v396, 4
      %v399 = vshll.u32 %v297, 16
      %v401 = vrot.slane %v399, 5
      %v402 = vsel %vm330, %v397, %v401
      %v404 = vshrl.u32 %v298, 16
      %v406 = vrot.slane %v404, 4
      %v407 = vshll.u32 %v298, 16
      %v409 = vrot.slane %v407, 5
      %v410 = vor.u32 %v406, %v409
      %v411 = vrot.slane %v410, 4
      %v413 = vshll.u32 %v299, 16
      %v415 = vrot.slane %v413, 5
      %v416 = vsel %vm330, %v411, %v415
      %v417 = vshrl.u32 %v299, 16
      %v419 = vrot.slane %v417, 4
      %v420 = vor.u32 %v419, %v415
      %v421 = vrot.slane %v420, 4
      %v423 = vshll.u32 %v300, 16
      %v425 = vrot.slane %v423, 5
      %v426 = vsel %vm330, %v421, %v425
      %v428 = vshrl.u32 %v301, 16
      %v430 = vrot.slane %v428, 4
      %v431 = vshll.u32 %v301, 16
      %v433 = vrot.slane %v431, 5
      %v434 = vor.u32 %v430, %v433
      %v435 = vrot.slane %v434, 4
      %v437 = vshll.u32 %v302, 16
      %v439 = vrot.slane %v437, 5
      %v440 = vsel %vm330, %v435, %v439
      %v441 = vshrl.u32 %v302, 16
      %v443 = vrot.slane %v441, 4
      %v444 = vor.u32 %v443, %v439
      %v445 = vrot.slane %v444, 4
      %v447 = vshll.u32 %v303, 16
      %v449 = vrot.slane %v447, 5
      %v450 = vsel %vm330, %v445, %v449
      %v452 = vshrl.u32 %v304, 16
      %v454 = vrot.slane %v452, 4
      %v455 = vshll.u32 %v304, 16
      %v457 = vrot.slane %v455, 5
      %v458 = vor.u32 %v454, %v457
      %v459 = vrot.slane %v458, 4
      %v461 = vshll.u32 %v305, 16
      %v463 = vrot.slane %v461, 5
      %v464 = vsel %vm330, %v459, %v463
      %v465 = vshrl.u32 %v305, 16
      %v467 = vrot.slane %v465, 4
      %v468 = vor.u32 %v467, %v463
      %v469 = vrot.slane %v468, 4
      %v471 = vshll.u32 %v306, 16
      %v473 = vrot.slane %v471, 5
      %v474 = vsel %vm330, %v469, %v473
      %v476 = vshrl.u32 %v307, 16
      %v478 = vrot.slane %v476, 4
      %v479 = vshll.u32 %v307, 16
      %v481 = vrot.slane %v479, 5
      %v482 = vor.u32 %v478, %v481
      %v483 = vrot.slane %v482, 4
      %v485 = vshll.u32 %v308, 16
      %v487 = vrot.slane %v485, 5
      %v488 = vsel %vm330, %v483, %v487
      %v489 = vshrl.u32 %v308, 16
      %v491 = vrot.slane %v489, 4
      %v492 = vor.u32 %v491, %v487
      %v493 = vrot.slane %v492, 4
      %v495 = vshll.u32 %v309, 16
      %v497 = vrot.slane %v495, 5
      %v498 = vsel %vm330, %v493, %v497
      %v500 = vshrl.u32 %v310, 16
      %v502 = vrot.slane %v500, 4
      %v503 = vshll.u32 %v310, 16
      %v505 = vrot.slane %v503, 5
      %v506 = vor.u32 %v502, %v505
      %v507 = vrot.slane %v506, 4
      %v509 = vshll.u32 %v311, 16
      %v511 = vrot.slane %v509, 5
      %v512 = vsel %vm330, %v507, %v511
      %v513 = vshrl.u32 %v311, 16
      %v515 = vrot.slane %v513, 4
      %v516 = vor.u32 %v515, %v511
      %v517 = vrot.slane %v516, 4
      %v519 = vshll.u32 %v312, 16
      %v521 = vrot.slane %v519, 5
      %v522 = vsel %vm330, %v517, %v521
      %v523 = vunpack.c.l.b16 %v344
      %v524 = vunpack.c.l.b16 %v354
      %v525 = vunpack.c.l.b16 %v368
      %v526 = vunpack.c.l.b16 %v378
      %v527 = vunpack.c.l.b16 %v392
      %v528 = vunpack.c.l.b16 %v402
      %v529 = vunpack.c.l.b16 %v416
      %v530 = vunpack.c.l.b16 %v426
      %v531 = vunpack.c.l.b16 %v440
      %v532 = vunpack.c.l.b16 %v450
      %v533 = vunpack.c.l.b16 %v464
      %v534 = vunpack.c.l.b16 %v474
      %v535 = vunpack.c.l.b16 %v488
      %v536 = vunpack.c.l.b16 %v498
      %v537 = vunpack.c.l.b16 %v512
      %v538 = vunpack.c.l.b16 %v522
      %v539 = vpack.c.b16 %v524, %v523
      %v540 = vpack.c.b16 %v526, %v525
      %v541 = vpack.c.b16 %v528, %v527
      %v542 = vpack.c.b16 %v530, %v529
      %v543 = vpack.c.b16 %v532, %v531
      %v544 = vpack.c.b16 %v534, %v533
      %v545 = vpack.c.b16 %v536, %v535
      %v546 = vpack.c.b16 %v538, %v537
      %vm547 = vcmask 31744
      %v549 = vsel %vm547, %v539, 0
      %v552 = vsel %vm547, %v540, 0
      %v555 = vsel %vm547, %v541, 0
      %v558 = vsel %vm547, %v542, 0
      %v561 = vsel %vm547, %v543, 0
      %v564 = vsel %vm547, %v544, 0
      %v567 = vsel %vm547, %v545, 0
      %v570 = vsel %vm547, %v546, 0
      %vm572 = vcmask 1041408
      %v574 = vsel %vm572, %v320, 0
      %576 = vmatpush.bf16.msra.mxu0 0
      %577 = vmatpush.bf16.msra.mxu0 0
      %578 = vmatpush.bf16.msra.mxu0 0
      %579 = vmatpush.bf16.msra.mxu0 0
      %580 = vmatpush.bf16.msra.mxu0 0
      %581 = vmatpush.bf16.msra.mxu0 0
      %582 = vmatpush.bf16.msra.mxu0 0
      %583 = vmatpush.bf16.msra.mxu0 %v574
      %584 = vmatmul.bf16.gmra.mxu0 %v549
      %v585 = vpop.f32.mrf.mxu0
      %v586 = vadd.f32 0.0, %v585
      %v587 = vpop.f32.mrf.mxu0
      %v588 = vadd.f32 0.0, %v587
      %589 = vmatmul.bf16.gmra.mxu0 %v552
      %v590 = vpop.f32.mrf.mxu0
      %v591 = vadd.f32 0.0, %v590
      %v592 = vpop.f32.mrf.mxu0
      %v593 = vadd.f32 0.0, %v592
      %594 = vmatmul.bf16.gmra.mxu0 %v555
      %v595 = vpop.f32.mrf.mxu0
      %v596 = vadd.f32 0.0, %v595
      %v597 = vpop.f32.mrf.mxu0
      %v598 = vadd.f32 0.0, %v597
      %599 = vmatmul.bf16.gmra.mxu0 %v558
      %v600 = vpop.f32.mrf.mxu0
      %v601 = vadd.f32 0.0, %v600
      %v602 = vpop.f32.mrf.mxu0
      %v603 = vadd.f32 0.0, %v602
      %604 = vmatmul.bf16.gmra.mxu0 %v561
      %v605 = vpop.f32.mrf.mxu0
      %v606 = vadd.f32 0.0, %v605
      %v607 = vpop.f32.mrf.mxu0
      %v608 = vadd.f32 0.0, %v607
      %609 = vmatmul.bf16.gmra.mxu0 %v564
      %v610 = vpop.f32.mrf.mxu0
      %v611 = vadd.f32 0.0, %v610
      %v612 = vpop.f32.mrf.mxu0
      %v613 = vadd.f32 0.0, %v612
      %614 = vmatmul.bf16.gmra.mxu0 %v567
      %v615 = vpop.f32.mrf.mxu0
      %v616 = vadd.f32 0.0, %v615
      %v617 = vpop.f32.mrf.mxu0
      %v618 = vadd.f32 0.0, %v617
      %619 = vmatmul.bf16.gmra.mxu0 %v570
      %v620 = vpop.f32.mrf.mxu0
      %v621 = vadd.f32 0.0, %v620
      %v622 = vpop.f32.mrf.mxu0
      %v623 = vadd.f32 0.0, %v622
      %624 = vdwg.mxu0
      %v641 = vunpack.c.l.b16 %v289
      %v642 = vunpack.c.l.b16 %v290
      %v643 = vunpack.c.l.b16 %v292
      %v644 = vunpack.c.l.b16 %v293
      %v645 = vunpack.c.l.b16 %v295
      %v646 = vunpack.c.l.b16 %v296
      %v647 = vunpack.c.l.b16 %v298
      %v648 = vunpack.c.l.b16 %v299
      %v649 = vunpack.c.l.b16 %v301
      %v650 = vunpack.c.l.b16 %v302
      %v651 = vunpack.c.l.b16 %v304
      %v652 = vunpack.c.l.b16 %v305
      %v653 = vunpack.c.l.b16 %v307
      %v654 = vunpack.c.l.b16 %v308
      %v655 = vunpack.c.l.b16 %v310
      %v656 = vunpack.c.l.b16 %v311
      %v657 = vpack.c.b16 %v642, %v641
      %v658 = vpack.c.b16 %v644, %v643
      %v659 = vpack.c.b16 %v646, %v645
      %v660 = vpack.c.b16 %v648, %v647
      %v661 = vpack.c.b16 %v650, %v649
      %v662 = vpack.c.b16 %v652, %v651
      %v663 = vpack.c.b16 %v654, %v653
      %v664 = vpack.c.b16 %v656, %v655
      %v666 = vsel %vm547, %v657, 0
      %v669 = vsel %vm547, %v658, 0
      %v672 = vsel %vm547, %v659, 0
      %v675 = vsel %vm547, %v660, 0
      %v678 = vsel %vm547, %v661, 0
      %v681 = vsel %vm547, %v662, 0
      %v684 = vsel %vm547, %v663, 0
      %v687 = vsel %vm547, %v664, 0
      %v690 = vsel %vm572, %v319, 0
      %692 = vmatpush.bf16.msra.mxu0 0
      %693 = vmatpush.bf16.msra.mxu0 0
      %694 = vmatpush.bf16.msra.mxu0 0
      %695 = vmatpush.bf16.msra.mxu0 0
      %696 = vmatpush.bf16.msra.mxu0 0
      %697 = vmatpush.bf16.msra.mxu0 0
      %698 = vmatpush.bf16.msra.mxu0 0
      %699 = vmatpush.bf16.msra.mxu0 %v690
      %700 = vmatmul.bf16.gmra.mxu0 %v666
      %v701 = vpop.f32.mrf.mxu0
      %v702 = vadd.f32 %v586, %v701
      %v703 = vpop.f32.mrf.mxu0
      %v704 = vadd.f32 %v588, %v703
      %705 = vmatmul.bf16.gmra.mxu0 %v669
      %v706 = vpop.f32.mrf.mxu0
      %v707 = vadd.f32 %v591, %v706
      %v708 = vpop.f32.mrf.mxu0
      %v709 = vadd.f32 %v593, %v708
      %710 = vmatmul.bf16.gmra.mxu0 %v672
      %v711 = vpop.f32.mrf.mxu0
      %v712 = vadd.f32 %v596, %v711
      %v713 = vpop.f32.mrf.mxu0
      %v714 = vadd.f32 %v598, %v713
      %715 = vmatmul.bf16.gmra.mxu0 %v675
      %v716 = vpop.f32.mrf.mxu0
      %v717 = vadd.f32 %v601, %v716
      %v718 = vpop.f32.mrf.mxu0
      %v719 = vadd.f32 %v603, %v718
      %720 = vmatmul.bf16.gmra.mxu0 %v678
      %v721 = vpop.f32.mrf.mxu0
      %v722 = vadd.f32 %v606, %v721
      %v723 = vpop.f32.mrf.mxu0
      %v724 = vadd.f32 %v608, %v723
      %725 = vmatmul.bf16.gmra.mxu0 %v681
      %v726 = vpop.f32.mrf.mxu0
      %v727 = vadd.f32 %v611, %v726
      %v728 = vpop.f32.mrf.mxu0
      %v729 = vadd.f32 %v613, %v728
      %730 = vmatmul.bf16.gmra.mxu0 %v684
      %v731 = vpop.f32.mrf.mxu0
      %v732 = vadd.f32 %v616, %v731
      %v733 = vpop.f32.mrf.mxu0
      %v734 = vadd.f32 %v618, %v733
      %735 = vmatmul.bf16.gmra.mxu0 %v687
      %v736 = vpop.f32.mrf.mxu0
      %v737 = vadd.f32 %v621, %v736
      %v738 = vpop.f32.mrf.mxu0
      %v739 = vadd.f32 %v623, %v738
      %740 = vdwg.mxu0
      %vm749 = vcmask 1042432
      %vm750 = vcmask 1046532
      %vm751 = vmor %vm749, %vm750
      %v752 = vrot.slane %v289, 5
      %v753 = vrot.slane %v752, 4
      %v754 = vrot.slane %v290, 5
      %v755 = vsel %vm751, %v753, %v754
      %v756 = vrot.slane %v754, 4
      %v757 = vrot.slane %v291, 5
      %v758 = vsel %vm751, %v756, %v757
      %v759 = vrot.slane %v292, 5
      %v760 = vrot.slane %v759, 4
      %v761 = vrot.slane %v293, 5
      %v762 = vsel %vm751, %v760, %v761
      %v763 = vrot.slane %v761, 4
      %v764 = vrot.slane %v294, 5
      %v765 = vsel %vm751, %v763, %v764
      %v766 = vrot.slane %v295, 5
      %v767 = vrot.slane %v766, 4
      %v768 = vrot.slane %v296, 5
      %v769 = vsel %vm751, %v767, %v768
      %v770 = vrot.slane %v768, 4
      %v771 = vrot.slane %v297, 5
      %v772 = vsel %vm751, %v770, %v771
      %v773 = vrot.slane %v298, 5
      %v774 = vrot.slane %v773, 4
      %v775 = vrot.slane %v299, 5
      %v776 = vsel %vm751, %v774, %v775
      %v777 = vrot.slane %v775, 4
      %v778 = vrot.slane %v300, 5
      %v779 = vsel %vm751, %v777, %v778
      %v780 = vrot.slane %v301, 5
      %v781 = vrot.slane %v780, 4
      %v782 = vrot.slane %v302, 5
      %v783 = vsel %vm751, %v781, %v782
      %v784 = vrot.slane %v782, 4
      %v785 = vrot.slane %v303, 5
      %v786 = vsel %vm751, %v784, %v785
      %v787 = vrot.slane %v304, 5
      %v788 = vrot.slane %v787, 4
      %v789 = vrot.slane %v305, 5
      %v790 = vsel %vm751, %v788, %v789
      %v791 = vrot.slane %v789, 4
      %v792 = vrot.slane %v306, 5
      %v793 = vsel %vm751, %v791, %v792
      %v794 = vrot.slane %v307, 5
      %v795 = vrot.slane %v794, 4
      %v796 = vrot.slane %v308, 5
      %v797 = vsel %vm751, %v795, %v796
      %v798 = vrot.slane %v796, 4
      %v799 = vrot.slane %v309, 5
      %v800 = vsel %vm751, %v798, %v799
      %v801 = vrot.slane %v310, 5
      %v802 = vrot.slane %v801, 4
      %v803 = vrot.slane %v311, 5
      %v804 = vsel %vm751, %v802, %v803
      %v805 = vrot.slane %v803, 4
      %v806 = vrot.slane %v312, 5
      %v807 = vsel %vm751, %v805, %v806
      %v808 = vunpack.c.l.b16 %v755
      %v809 = vunpack.c.l.b16 %v758
      %v810 = vunpack.c.l.b16 %v762
      %v811 = vunpack.c.l.b16 %v765
      %v812 = vunpack.c.l.b16 %v769
      %v813 = vunpack.c.l.b16 %v772
      %v814 = vunpack.c.l.b16 %v776
      %v815 = vunpack.c.l.b16 %v779
      %v816 = vunpack.c.l.b16 %v783
      %v817 = vunpack.c.l.b16 %v786
      %v818 = vunpack.c.l.b16 %v790
      %v819 = vunpack.c.l.b16 %v793
      %v820 = vunpack.c.l.b16 %v797
      %v821 = vunpack.c.l.b16 %v800
      %v822 = vunpack.c.l.b16 %v804
      %v823 = vunpack.c.l.b16 %v807
      %v824 = vpack.c.b16 %v809, %v808
      %v825 = vpack.c.b16 %v811, %v810
      %v826 = vpack.c.b16 %v813, %v812
      %v827 = vpack.c.b16 %v815, %v814
      %v828 = vpack.c.b16 %v817, %v816
      %v829 = vpack.c.b16 %v819, %v818
      %v830 = vpack.c.b16 %v821, %v820
      %v831 = vpack.c.b16 %v823, %v822
      %v833 = vsel %vm547, %v824, 0
      %v836 = vsel %vm547, %v825, 0
      %v839 = vsel %vm547, %v826, 0
      %v842 = vsel %vm547, %v827, 0
      %v845 = vsel %vm547, %v828, 0
      %v848 = vsel %vm547, %v829, 0
      %v851 = vsel %vm547, %v830, 0
      %v854 = vsel %vm547, %v831, 0
      %v857 = vsel %vm572, %v321, 0
      %859 = vmatpush.bf16.msra.mxu0 0
      %860 = vmatpush.bf16.msra.mxu0 0
      %861 = vmatpush.bf16.msra.mxu0 0
      %862 = vmatpush.bf16.msra.mxu0 0
      %863 = vmatpush.bf16.msra.mxu0 0
      %864 = vmatpush.bf16.msra.mxu0 0
      %865 = vmatpush.bf16.msra.mxu0 0
      %866 = vmatpush.bf16.msra.mxu0 %v857
      %867 = vmatmul.bf16.gmra.mxu0 %v833
      %v868 = vpop.f32.mrf.mxu0
      %v869 = vadd.f32 0.0, %v868
      %v870 = vpop.f32.mrf.mxu0
      %v871 = vadd.f32 0.0, %v870
      %872 = vmatmul.bf16.gmra.mxu0 %v836
      %v873 = vpop.f32.mrf.mxu0
      %v874 = vadd.f32 0.0, %v873
      %v875 = vpop.f32.mrf.mxu0
      %v876 = vadd.f32 0.0, %v875
      %877 = vmatmul.bf16.gmra.mxu0 %v839
      %v878 = vpop.f32.mrf.mxu0
      %v879 = vadd.f32 0.0, %v878
      %v880 = vpop.f32.mrf.mxu0
      %v881 = vadd.f32 0.0, %v880
      %882 = vmatmul.bf16.gmra.mxu0 %v842
      %v883 = vpop.f32.mrf.mxu0
      %v884 = vadd.f32 0.0, %v883
      %v885 = vpop.f32.mrf.mxu0
      %v886 = vadd.f32 0.0, %v885
      %887 = vmatmul.bf16.gmra.mxu0 %v845
      %v888 = vpop.f32.mrf.mxu0
      %v889 = vadd.f32 0.0, %v888
      %v890 = vpop.f32.mrf.mxu0
      %v891 = vadd.f32 0.0, %v890
      %892 = vmatmul.bf16.gmra.mxu0 %v848
      %v893 = vpop.f32.mrf.mxu0
      %v894 = vadd.f32 0.0, %v893
      %v895 = vpop.f32.mrf.mxu0
      %v896 = vadd.f32 0.0, %v895
      %897 = vmatmul.bf16.gmra.mxu0 %v851
      %v898 = vpop.f32.mrf.mxu0
      %v899 = vadd.f32 0.0, %v898
      %v900 = vpop.f32.mrf.mxu0
      %v901 = vadd.f32 0.0, %v900
      %902 = vmatmul.bf16.gmra.mxu0 %v854
      %v903 = vpop.f32.mrf.mxu0
      %v904 = vadd.f32 0.0, %v903
      %v905 = vpop.f32.mrf.mxu0
      %v906 = vadd.f32 0.0, %v905
      %907 = vdwg.mxu0
      %v908 = vadd.f32 %v702, %v869
      %v909 = vadd.f32 %v704, %v871
      %v910 = vadd.f32 %v707, %v874
      %v911 = vadd.f32 %v709, %v876
      %v912 = vadd.f32 %v712, %v879
      %v913 = vadd.f32 %v714, %v881
      %v914 = vadd.f32 %v717, %v884
      %v915 = vadd.f32 %v719, %v886
      %v916 = vadd.f32 %v722, %v889
      %v917 = vadd.f32 %v724, %v891
      %v918 = vadd.f32 %v727, %v894
      %v919 = vadd.f32 %v729, %v896
      %v920 = vadd.f32 %v732, %v899
      %v921 = vadd.f32 %v734, %v901
      %v922 = vadd.f32 %v737, %v904
      %v923 = vadd.f32 %v739, %v906
      %v926 = vunpack.c.l.b16 %v313
      %v927 = vunpack.c.l.b16 %v314
      %v928 = vpack.c.b16 %v927, %v926
      %v930 = vsel %vm547, %v928, 0
      %v933 = vsel %vm572, %v322, 0
      %935 = vmatpush.bf16.msra.mxu0 0
      %936 = vmatpush.bf16.msra.mxu0 0
      %937 = vmatpush.bf16.msra.mxu0 0
      %938 = vmatpush.bf16.msra.mxu0 0
      %939 = vmatpush.bf16.msra.mxu0 0
      %940 = vmatpush.bf16.msra.mxu0 0
      %941 = vmatpush.bf16.msra.mxu0 0
      %942 = vmatpush.bf16.msra.mxu0 %v933
      %943 = vmatmul.bf16.gmra.mxu0 %v669
      %v944 = vpop.f32.mrf.mxu0
      %v945 = vadd.f32 0.0, %v944
      %v946 = vpop.f32.mrf.mxu0
      %v947 = vadd.f32 0.0, %v946
      %948 = vmatmul.bf16.gmra.mxu0 %v672
      %v949 = vpop.f32.mrf.mxu0
      %v950 = vadd.f32 0.0, %v949
      %v951 = vpop.f32.mrf.mxu0
      %v952 = vadd.f32 0.0, %v951
      %953 = vmatmul.bf16.gmra.mxu0 %v675
      %v954 = vpop.f32.mrf.mxu0
      %v955 = vadd.f32 0.0, %v954
      %v956 = vpop.f32.mrf.mxu0
      %v957 = vadd.f32 0.0, %v956
      %958 = vmatmul.bf16.gmra.mxu0 %v678
      %v959 = vpop.f32.mrf.mxu0
      %v960 = vadd.f32 0.0, %v959
      %v961 = vpop.f32.mrf.mxu0
      %v962 = vadd.f32 0.0, %v961
      %963 = vmatmul.bf16.gmra.mxu0 %v681
      %v964 = vpop.f32.mrf.mxu0
      %v965 = vadd.f32 0.0, %v964
      %v966 = vpop.f32.mrf.mxu0
      %v967 = vadd.f32 0.0, %v966
      %968 = vmatmul.bf16.gmra.mxu0 %v684
      %v969 = vpop.f32.mrf.mxu0
      %v970 = vadd.f32 0.0, %v969
      %v971 = vpop.f32.mrf.mxu0
      %v972 = vadd.f32 0.0, %v971
      %973 = vmatmul.bf16.gmra.mxu0 %v687
      %v974 = vpop.f32.mrf.mxu0
      %v975 = vadd.f32 0.0, %v974
      %v976 = vpop.f32.mrf.mxu0
      %v977 = vadd.f32 0.0, %v976
      %978 = vmatmul.bf16.gmra.mxu0 %v930
      %v979 = vpop.f32.mrf.mxu0
      %v980 = vadd.f32 0.0, %v979
      %v981 = vpop.f32.mrf.mxu0
      %v982 = vadd.f32 0.0, %v981
      %983 = vdwg.mxu0
      %v984 = vadd.f32 %v908, %v945
      %v985 = vadd.f32 %v909, %v947
      %v986 = vadd.f32 %v910, %v950
      %v987 = vadd.f32 %v911, %v952
      %v988 = vadd.f32 %v912, %v955
      %v989 = vadd.f32 %v913, %v957
      %v990 = vadd.f32 %v914, %v960
      %v991 = vadd.f32 %v915, %v962
      %v992 = vadd.f32 %v916, %v965
      %v993 = vadd.f32 %v917, %v967
      %v994 = vadd.f32 %v918, %v970
      %v995 = vadd.f32 %v919, %v972
      %v996 = vadd.f32 %v920, %v975
      %v997 = vadd.f32 %v921, %v977
      %v998 = vadd.f32 %v922, %v980
      %v999 = vadd.f32 %v923, %v982
      %v1001 = vshrl.u32 %v313, 16
      %v1003 = vrot.slane %v1001, 4
      %v1004 = vshll.u32 %v313, 16
      %v1006 = vrot.slane %v1004, 5
      %v1007 = vor.u32 %v1003, %v1006
      %v1008 = vrot.slane %v1007, 4
      %v1010 = vshll.u32 %v314, 16
      %v1012 = vrot.slane %v1010, 5
      %v1013 = vsel %vm330, %v1008, %v1012
      %v1014 = vshrl.u32 %v314, 16
      %v1016 = vrot.slane %v1014, 4
      %v1017 = vor.u32 %v1016, %v1012
      %v1018 = vrot.slane %v1017, 4
      %v1020 = vshll.u32 %v315, 16
      %v1022 = vrot.slane %v1020, 5
      %v1023 = vsel %vm330, %v1018, %v1022
      %v1024 = vunpack.c.l.b16 %v1013
      %v1025 = vunpack.c.l.b16 %v1023
      %v1026 = vpack.c.b16 %v1025, %v1024
      %v1028 = vsel %vm547, %v1026, 0
      %v1031 = vsel %vm572, %v323, 0
      %1033 = vmatpush.bf16.msra.mxu0 0
      %1034 = vmatpush.bf16.msra.mxu0 0
      %1035 = vmatpush.bf16.msra.mxu0 0
      %1036 = vmatpush.bf16.msra.mxu0 0
      %1037 = vmatpush.bf16.msra.mxu0 0
      %1038 = vmatpush.bf16.msra.mxu0 0
      %1039 = vmatpush.bf16.msra.mxu0 0
      %1040 = vmatpush.bf16.msra.mxu0 %v1031
      %1041 = vmatmul.bf16.gmra.mxu0 %v552
      %v1042 = vpop.f32.mrf.mxu0
      %v1043 = vadd.f32 0.0, %v1042
      %v1044 = vpop.f32.mrf.mxu0
      %v1045 = vadd.f32 0.0, %v1044
      %1046 = vmatmul.bf16.gmra.mxu0 %v555
      %v1047 = vpop.f32.mrf.mxu0
      %v1048 = vadd.f32 0.0, %v1047
      %v1049 = vpop.f32.mrf.mxu0
      %v1050 = vadd.f32 0.0, %v1049
      %1051 = vmatmul.bf16.gmra.mxu0 %v558
      %v1052 = vpop.f32.mrf.mxu0
      %v1053 = vadd.f32 0.0, %v1052
      %v1054 = vpop.f32.mrf.mxu0
      %v1055 = vadd.f32 0.0, %v1054
      %1056 = vmatmul.bf16.gmra.mxu0 %v561
      %v1057 = vpop.f32.mrf.mxu0
      %v1058 = vadd.f32 0.0, %v1057
      %v1059 = vpop.f32.mrf.mxu0
      %v1060 = vadd.f32 0.0, %v1059
      %1061 = vmatmul.bf16.gmra.mxu0 %v564
      %v1062 = vpop.f32.mrf.mxu0
      %v1063 = vadd.f32 0.0, %v1062
      %v1064 = vpop.f32.mrf.mxu0
      %v1065 = vadd.f32 0.0, %v1064
      %1066 = vmatmul.bf16.gmra.mxu0 %v567
      %v1067 = vpop.f32.mrf.mxu0
      %v1068 = vadd.f32 0.0, %v1067
      %v1069 = vpop.f32.mrf.mxu0
      %v1070 = vadd.f32 0.0, %v1069
      %1071 = vmatmul.bf16.gmra.mxu0 %v570
      %v1072 = vpop.f32.mrf.mxu0
      %v1073 = vadd.f32 0.0, %v1072
      %v1074 = vpop.f32.mrf.mxu0
      %v1075 = vadd.f32 0.0, %v1074
      %1076 = vmatmul.bf16.gmra.mxu0 %v1028
      %v1077 = vpop.f32.mrf.mxu0
      %v1078 = vadd.f32 0.0, %v1077
      %v1079 = vpop.f32.mrf.mxu0
      %v1080 = vadd.f32 0.0, %v1079
      %1081 = vdwg.mxu0
      %v1082 = vadd.f32 %v984, %v1043
      %v1083 = vadd.f32 %v985, %v1045
      %v1084 = vadd.f32 %v986, %v1048
      %v1085 = vadd.f32 %v987, %v1050
      %v1086 = vadd.f32 %v988, %v1053
      %v1087 = vadd.f32 %v989, %v1055
      %v1088 = vadd.f32 %v990, %v1058
      %v1089 = vadd.f32 %v991, %v1060
      %v1090 = vadd.f32 %v992, %v1063
      %v1091 = vadd.f32 %v993, %v1065
      %v1092 = vadd.f32 %v994, %v1068
      %v1093 = vadd.f32 %v995, %v1070
      %v1094 = vadd.f32 %v996, %v1073
      %v1095 = vadd.f32 %v997, %v1075
      %v1096 = vadd.f32 %v998, %v1078
      %v1097 = vadd.f32 %v999, %v1080
      %v1099 = vrot.slane %v313, 5
      %v1100 = vrot.slane %v1099, 4
      %v1101 = vrot.slane %v314, 5
      %v1102 = vsel %vm751, %v1100, %v1101
      %v1103 = vrot.slane %v1101, 4
      %v1104 = vrot.slane %v315, 5
      %v1105 = vsel %vm751, %v1103, %v1104
      %v1106 = vunpack.c.l.b16 %v1102
      %v1107 = vunpack.c.l.b16 %v1105
      %v1108 = vpack.c.b16 %v1107, %v1106
      %v1110 = vsel %vm547, %v1108, 0
      %v1113 = vsel %vm572, %v324, 0
      %1115 = vmatpush.bf16.msra.mxu0 0
      %1116 = vmatpush.bf16.msra.mxu0 0
      %1117 = vmatpush.bf16.msra.mxu0 0
      %1118 = vmatpush.bf16.msra.mxu0 0
      %1119 = vmatpush.bf16.msra.mxu0 0
      %1120 = vmatpush.bf16.msra.mxu0 0
      %1121 = vmatpush.bf16.msra.mxu0 0
      %1122 = vmatpush.bf16.msra.mxu0 %v1113
      %1123 = vmatmul.bf16.gmra.mxu0 %v836
      %v1124 = vpop.f32.mrf.mxu0
      %v1125 = vadd.f32 0.0, %v1124
      %v1126 = vpop.f32.mrf.mxu0
      %v1127 = vadd.f32 0.0, %v1126
      %1128 = vmatmul.bf16.gmra.mxu0 %v839
      %v1129 = vpop.f32.mrf.mxu0
      %v1130 = vadd.f32 0.0, %v1129
      %v1131 = vpop.f32.mrf.mxu0
      %v1132 = vadd.f32 0.0, %v1131
      %1133 = vmatmul.bf16.gmra.mxu0 %v842
      %v1134 = vpop.f32.mrf.mxu0
      %v1135 = vadd.f32 0.0, %v1134
      %v1136 = vpop.f32.mrf.mxu0
      %v1137 = vadd.f32 0.0, %v1136
      %1138 = vmatmul.bf16.gmra.mxu0 %v845
      %v1139 = vpop.f32.mrf.mxu0
      %v1140 = vadd.f32 0.0, %v1139
      %v1141 = vpop.f32.mrf.mxu0
      %v1142 = vadd.f32 0.0, %v1141
      %1143 = vmatmul.bf16.gmra.mxu0 %v848
      %v1144 = vpop.f32.mrf.mxu0
      %v1145 = vadd.f32 0.0, %v1144
      %v1146 = vpop.f32.mrf.mxu0
      %v1147 = vadd.f32 0.0, %v1146
      %1148 = vmatmul.bf16.gmra.mxu0 %v851
      %v1149 = vpop.f32.mrf.mxu0
      %v1150 = vadd.f32 0.0, %v1149
      %v1151 = vpop.f32.mrf.mxu0
      %v1152 = vadd.f32 0.0, %v1151
      %1153 = vmatmul.bf16.gmra.mxu0 %v854
      %v1154 = vpop.f32.mrf.mxu0
      %v1155 = vadd.f32 0.0, %v1154
      %v1156 = vpop.f32.mrf.mxu0
      %v1157 = vadd.f32 0.0, %v1156
      %1158 = vmatmul.bf16.gmra.mxu0 %v1110
      %v1159 = vpop.f32.mrf.mxu0
      %v1160 = vadd.f32 0.0, %v1159
      %v1161 = vpop.f32.mrf.mxu0
      %v1162 = vadd.f32 0.0, %v1161
      %1163 = vdwg.mxu0
      %v1164 = vadd.f32 %v1082, %v1125
      %v1165 = vadd.f32 %v1083, %v1127
      %v1166 = vadd.f32 %v1084, %v1130
      %v1167 = vadd.f32 %v1085, %v1132
      %v1168 = vadd.f32 %v1086, %v1135
      %v1169 = vadd.f32 %v1087, %v1137
      %v1170 = vadd.f32 %v1088, %v1140
      %v1171 = vadd.f32 %v1089, %v1142
      %v1172 = vadd.f32 %v1090, %v1145
      %v1173 = vadd.f32 %v1091, %v1147
      %v1174 = vadd.f32 %v1092, %v1150
      %v1175 = vadd.f32 %v1093, %v1152
      %v1176 = vadd.f32 %v1094, %v1155
      %v1177 = vadd.f32 %v1095, %v1157
      %v1178 = vadd.f32 %v1096, %v1160
      %v1179 = vadd.f32 %v1097, %v1162
      %v1182 = vunpack.c.l.b16 %v316
      %v1183 = vunpack.c.l.b16 %v317
      %v1184 = vpack.c.b16 %v1183, %v1182
      %v1186 = vsel %vm547, %v1184, 0
      %v1189 = vsel %vm572, %v325, 0
      %1191 = vmatpush.bf16.msra.mxu0 0
      %1192 = vmatpush.bf16.msra.mxu0 0
      %1193 = vmatpush.bf16.msra.mxu0 0
      %1194 = vmatpush.bf16.msra.mxu0 0
      %1195 = vmatpush.bf16.msra.mxu0 0
      %1196 = vmatpush.bf16.msra.mxu0 0
      %1197 = vmatpush.bf16.msra.mxu0 0
      %1198 = vmatpush.bf16.msra.mxu0 %v1189
      %1199 = vmatmul.bf16.gmra.mxu0 %v672
      %v1200 = vpop.f32.mrf.mxu0
      %v1201 = vadd.f32 0.0, %v1200
      %v1202 = vpop.f32.mrf.mxu0
      %v1203 = vadd.f32 0.0, %v1202
      %1204 = vmatmul.bf16.gmra.mxu0 %v675
      %v1205 = vpop.f32.mrf.mxu0
      %v1206 = vadd.f32 0.0, %v1205
      %v1207 = vpop.f32.mrf.mxu0
      %v1208 = vadd.f32 0.0, %v1207
      %1209 = vmatmul.bf16.gmra.mxu0 %v678
      %v1210 = vpop.f32.mrf.mxu0
      %v1211 = vadd.f32 0.0, %v1210
      %v1212 = vpop.f32.mrf.mxu0
      %v1213 = vadd.f32 0.0, %v1212
      %1214 = vmatmul.bf16.gmra.mxu0 %v681
      %v1215 = vpop.f32.mrf.mxu0
      %v1216 = vadd.f32 0.0, %v1215
      %v1217 = vpop.f32.mrf.mxu0
      %v1218 = vadd.f32 0.0, %v1217
      %1219 = vmatmul.bf16.gmra.mxu0 %v684
      %v1220 = vpop.f32.mrf.mxu0
      %v1221 = vadd.f32 0.0, %v1220
      %v1222 = vpop.f32.mrf.mxu0
      %v1223 = vadd.f32 0.0, %v1222
      %1224 = vmatmul.bf16.gmra.mxu0 %v687
      %v1225 = vpop.f32.mrf.mxu0
      %v1226 = vadd.f32 0.0, %v1225
      %v1227 = vpop.f32.mrf.mxu0
      %v1228 = vadd.f32 0.0, %v1227
      %1229 = vmatmul.bf16.gmra.mxu0 %v930
      %v1230 = vpop.f32.mrf.mxu0
      %v1231 = vadd.f32 0.0, %v1230
      %v1232 = vpop.f32.mrf.mxu0
      %v1233 = vadd.f32 0.0, %v1232
      %1234 = vmatmul.bf16.gmra.mxu0 %v1186
      %v1235 = vpop.f32.mrf.mxu0
      %v1236 = vadd.f32 0.0, %v1235
      %v1237 = vpop.f32.mrf.mxu0
      %v1238 = vadd.f32 0.0, %v1237
      %1239 = vdwg.mxu0
      %v1240 = vadd.f32 %v1164, %v1201
      %v1241 = vadd.f32 %v1165, %v1203
      %v1242 = vadd.f32 %v1166, %v1206
      %v1243 = vadd.f32 %v1167, %v1208
      %v1244 = vadd.f32 %v1168, %v1211
      %v1245 = vadd.f32 %v1169, %v1213
      %v1246 = vadd.f32 %v1170, %v1216
      %v1247 = vadd.f32 %v1171, %v1218
      %v1248 = vadd.f32 %v1172, %v1221
      %v1249 = vadd.f32 %v1173, %v1223
      %v1250 = vadd.f32 %v1174, %v1226
      %v1251 = vadd.f32 %v1175, %v1228
      %v1252 = vadd.f32 %v1176, %v1231
      %v1253 = vadd.f32 %v1177, %v1233
      %v1254 = vadd.f32 %v1178, %v1236
      %v1255 = vadd.f32 %v1179, %v1238
      %v1257 = vshrl.u32 %v316, 16
      %v1259 = vrot.slane %v1257, 4
      %v1260 = vshll.u32 %v316, 16
      %v1262 = vrot.slane %v1260, 5
      %v1263 = vor.u32 %v1259, %v1262
      %v1264 = vrot.slane %v1263, 4
      %v1266 = vshll.u32 %v317, 16
      %v1268 = vrot.slane %v1266, 5
      %v1269 = vsel %vm330, %v1264, %v1268
      %v1270 = vshrl.u32 %v317, 16
      %v1272 = vrot.slane %v1270, 4
      %v1273 = vor.u32 %v1272, %v1268
      %v1274 = vrot.slane %v1273, 4
      %v1276 = vshll.u32 %v318, 16
      %v1278 = vrot.slane %v1276, 5
      %v1279 = vsel %vm330, %v1274, %v1278
      %v1280 = vunpack.c.l.b16 %v1269
      %v1281 = vunpack.c.l.b16 %v1279
      %v1282 = vpack.c.b16 %v1281, %v1280
      %v1284 = vsel %vm547, %v1282, 0
      %v1287 = vsel %vm572, %v326, 0
      %1289 = vmatpush.bf16.msra.mxu0 0
      %1290 = vmatpush.bf16.msra.mxu0 0
      %1291 = vmatpush.bf16.msra.mxu0 0
      %1292 = vmatpush.bf16.msra.mxu0 0
      %1293 = vmatpush.bf16.msra.mxu0 0
      %1294 = vmatpush.bf16.msra.mxu0 0
      %1295 = vmatpush.bf16.msra.mxu0 0
      %1296 = vmatpush.bf16.msra.mxu0 %v1287
      %1297 = vmatmul.bf16.gmra.mxu0 %v555
      %v1298 = vpop.f32.mrf.mxu0
      %v1299 = vadd.f32 0.0, %v1298
      %v1300 = vpop.f32.mrf.mxu0
      %v1301 = vadd.f32 0.0, %v1300
      %1302 = vmatmul.bf16.gmra.mxu0 %v558
      %v1303 = vpop.f32.mrf.mxu0
      %v1304 = vadd.f32 0.0, %v1303
      %v1305 = vpop.f32.mrf.mxu0
      %v1306 = vadd.f32 0.0, %v1305
      %1307 = vmatmul.bf16.gmra.mxu0 %v561
      %v1308 = vpop.f32.mrf.mxu0
      %v1309 = vadd.f32 0.0, %v1308
      %v1310 = vpop.f32.mrf.mxu0
      %v1311 = vadd.f32 0.0, %v1310
      %1312 = vmatmul.bf16.gmra.mxu0 %v564
      %v1313 = vpop.f32.mrf.mxu0
      %v1314 = vadd.f32 0.0, %v1313
      %v1315 = vpop.f32.mrf.mxu0
      %v1316 = vadd.f32 0.0, %v1315
      %1317 = vmatmul.bf16.gmra.mxu0 %v567
      %v1318 = vpop.f32.mrf.mxu0
      %v1319 = vadd.f32 0.0, %v1318
      %v1320 = vpop.f32.mrf.mxu0
      %v1321 = vadd.f32 0.0, %v1320
      %1322 = vmatmul.bf16.gmra.mxu0 %v570
      %v1323 = vpop.f32.mrf.mxu0
      %v1324 = vadd.f32 0.0, %v1323
      %v1325 = vpop.f32.mrf.mxu0
      %v1326 = vadd.f32 0.0, %v1325
      %1327 = vmatmul.bf16.gmra.mxu0 %v1028
      %v1328 = vpop.f32.mrf.mxu0
      %v1329 = vadd.f32 0.0, %v1328
      %v1330 = vpop.f32.mrf.mxu0
      %v1331 = vadd.f32 0.0, %v1330
      %1332 = vmatmul.bf16.gmra.mxu0 %v1284
      %v1333 = vpop.f32.mrf.mxu0
      %v1334 = vadd.f32 0.0, %v1333
      %v1335 = vpop.f32.mrf.mxu0
      %v1336 = vadd.f32 0.0, %v1335
      %1337 = vdwg.mxu0
      %v1338 = vadd.f32 %v1240, %v1299
      %v1339 = vadd.f32 %v1241, %v1301
      %v1340 = vadd.f32 %v1242, %v1304
      %v1341 = vadd.f32 %v1243, %v1306
      %v1342 = vadd.f32 %v1244, %v1309
      %v1343 = vadd.f32 %v1245, %v1311
      %v1344 = vadd.f32 %v1246, %v1314
      %v1345 = vadd.f32 %v1247, %v1316
      %v1346 = vadd.f32 %v1248, %v1319
      %v1347 = vadd.f32 %v1249, %v1321
      %v1348 = vadd.f32 %v1250, %v1324
      %v1349 = vadd.f32 %v1251, %v1326
      %v1350 = vadd.f32 %v1252, %v1329
      %v1351 = vadd.f32 %v1253, %v1331
      %v1352 = vadd.f32 %v1254, %v1334
      %v1353 = vadd.f32 %v1255, %v1336
      %v1355 = vrot.slane %v316, 5
      %v1356 = vrot.slane %v1355, 4
      %v1357 = vrot.slane %v317, 5
      %v1358 = vsel %vm751, %v1356, %v1357
      %v1359 = vrot.slane %v1357, 4
      %v1360 = vrot.slane %v318, 5
      %v1361 = vsel %vm751, %v1359, %v1360
      %v1362 = vunpack.c.l.b16 %v1358
      %v1363 = vunpack.c.l.b16 %v1361
      %v1364 = vpack.c.b16 %v1363, %v1362
      %v1366 = vsel %vm547, %v1364, 0
      %v1369 = vsel %vm572, %v327, 0
      %1371 = vmatpush.bf16.msra.mxu0 0
      %1372 = vmatpush.bf16.msra.mxu0 0
      %1373 = vmatpush.bf16.msra.mxu0 0
      %1374 = vmatpush.bf16.msra.mxu0 0
      %1375 = vmatpush.bf16.msra.mxu0 0
      %1376 = vmatpush.bf16.msra.mxu0 0
      %1377 = vmatpush.bf16.msra.mxu0 0
      %1378 = vmatpush.bf16.msra.mxu0 %v1369
      %1379 = vmatmul.bf16.gmra.mxu0 %v839
      %v1380 = vpop.f32.mrf.mxu0
      %v1381 = vadd.f32 0.0, %v1380
      %v1382 = vpop.f32.mrf.mxu0
      %v1383 = vadd.f32 0.0, %v1382
      %1384 = vmatmul.bf16.gmra.mxu0 %v842
      %v1385 = vpop.f32.mrf.mxu0
      %v1386 = vadd.f32 0.0, %v1385
      %v1387 = vpop.f32.mrf.mxu0
      %v1388 = vadd.f32 0.0, %v1387
      %1389 = vmatmul.bf16.gmra.mxu0 %v845
      %v1390 = vpop.f32.mrf.mxu0
      %v1391 = vadd.f32 0.0, %v1390
      %v1392 = vpop.f32.mrf.mxu0
      %v1393 = vadd.f32 0.0, %v1392
      %1394 = vmatmul.bf16.gmra.mxu0 %v848
      %v1395 = vpop.f32.mrf.mxu0
      %v1396 = vadd.f32 0.0, %v1395
      %v1397 = vpop.f32.mrf.mxu0
      %v1398 = vadd.f32 0.0, %v1397
      %1399 = vmatmul.bf16.gmra.mxu0 %v851
      %v1400 = vpop.f32.mrf.mxu0
      %v1401 = vadd.f32 0.0, %v1400
      %v1402 = vpop.f32.mrf.mxu0
      %v1403 = vadd.f32 0.0, %v1402
      %1404 = vmatmul.bf16.gmra.mxu0 %v854
      %v1405 = vpop.f32.mrf.mxu0
      %v1406 = vadd.f32 0.0, %v1405
      %v1407 = vpop.f32.mrf.mxu0
      %v1408 = vadd.f32 0.0, %v1407
      %1409 = vmatmul.bf16.gmra.mxu0 %v1110
      %v1410 = vpop.f32.mrf.mxu0
      %v1411 = vadd.f32 0.0, %v1410
      %v1412 = vpop.f32.mrf.mxu0
      %v1413 = vadd.f32 0.0, %v1412
      %1414 = vmatmul.bf16.gmra.mxu0 %v1366
      %v1415 = vpop.f32.mrf.mxu0
      %v1416 = vadd.f32 0.0, %v1415
      %v1417 = vpop.f32.mrf.mxu0
      %v1418 = vadd.f32 0.0, %v1417
      %1419 = vdwg.mxu0
      %v1420 = vadd.f32 %v1338, %v1381
      %v1421 = vadd.f32 %v1339, %v1383
      %v1422 = vadd.f32 %v1340, %v1386
      %v1423 = vadd.f32 %v1341, %v1388
      %v1424 = vadd.f32 %v1342, %v1391
      %v1425 = vadd.f32 %v1343, %v1393
      %v1426 = vadd.f32 %v1344, %v1396
      %v1427 = vadd.f32 %v1345, %v1398
      %v1428 = vadd.f32 %v1346, %v1401
      %v1429 = vadd.f32 %v1347, %v1403
      %v1430 = vadd.f32 %v1348, %v1406
      %v1431 = vadd.f32 %v1349, %v1408
      %v1432 = vadd.f32 %v1350, %v1411
      %v1433 = vadd.f32 %v1351, %v1413
      %v1434 = vadd.f32 %v1352, %v1416
      %v1435 = vadd.f32 %v1353, %v1418
      %v1436 = vld [vmem:[%s3] sm:$0x1]
      %v1438 = vperm.slane %v1436, 0
      %v1440 = vadd.f32 %v1420, %v1438
      %v1441 = vadd.f32 %v1421, %v1438
      %v1442 = vadd.f32 %v1422, %v1438
      %v1443 = vadd.f32 %v1423, %v1438
      %v1444 = vadd.f32 %v1424, %v1438
      %v1445 = vadd.f32 %v1425, %v1438
      %v1446 = vadd.f32 %v1426, %v1438
      %v1447 = vadd.f32 %v1427, %v1438
      %v1448 = vadd.f32 %v1428, %v1438
      %v1449 = vadd.f32 %v1429, %v1438
      %v1450 = vadd.f32 %v1430, %v1438
      %v1451 = vadd.f32 %v1431, %v1438
      %v1452 = vadd.f32 %v1432, %v1438
      %v1453 = vadd.f32 %v1433, %v1438
      %v1454 = vadd.f32 %v1434, %v1438
      %v1455 = vadd.f32 %v1435, %v1438
      %v1456 = vmax.f32 %v1440, 0.0
      %v1457 = vmax.f32 %v1441, 0.0
      %v1458 = vmax.f32 %v1442, 0.0
      %v1459 = vmax.f32 %v1443, 0.0
      %v1460 = vmax.f32 %v1444, 0.0
      %v1461 = vmax.f32 %v1445, 0.0
      %v1462 = vmax.f32 %v1446, 0.0
      %v1463 = vmax.f32 %v1447, 0.0
      %v1464 = vmax.f32 %v1448, 0.0
      %v1465 = vmax.f32 %v1449, 0.0
      %v1466 = vmax.f32 %v1450, 0.0
      %v1467 = vmax.f32 %v1451, 0.0
      %v1468 = vmax.f32 %v1452, 0.0
      %v1469 = vmax.f32 %v1453, 0.0
      %v1470 = vmax.f32 %v1454, 0.0
      %v1471 = vmax.f32 %v1455, 0.0
      %v1472 = vpack.c.bf16 %v1456, %v1456
      %v1473 = vpack.c.bf16 %v1457, %v1457
      %v1474 = vpack.c.bf16 %v1458, %v1458
      %v1475 = vpack.c.bf16 %v1459, %v1459
      %v1476 = vpack.c.bf16 %v1460, %v1460
      %v1477 = vpack.c.bf16 %v1461, %v1461
      %v1478 = vpack.c.bf16 %v1462, %v1462
      %v1479 = vpack.c.bf16 %v1463, %v1463
      %v1480 = vpack.c.bf16 %v1464, %v1464
      %v1481 = vpack.c.bf16 %v1465, %v1465
      %v1482 = vpack.c.bf16 %v1466, %v1466
      %v1483 = vpack.c.bf16 %v1467, %v1467
      %v1484 = vpack.c.bf16 %v1468, %v1468
      %v1485 = vpack.c.bf16 %v1469, %v1469
      %v1486 = vpack.c.bf16 %v1470, %v1470
      %v1487 = vpack.c.bf16 %v1471, %v1471
      %vm1488 = vcmask 60416
      %1489 = vst.msk [vmem:[%s286] sm:$0xf] %vm1488, %v1472
      %1490 = vst.msk [vmem:[%s286 + $0x4] sm:$0xf] %vm1488, %v1473
      %1491 = vst.msk [vmem:[%s286 + $0x8] sm:$0xf] %vm1488, %v1474
      %1492 = vst.msk [vmem:[%s286 + $0xc] sm:$0xf] %vm1488, %v1475
      %1493 = vst.msk [vmem:[%s286 + $0x10] sm:$0xf] %vm1488, %v1476
      %1494 = vst.msk [vmem:[%s286 + $0x14] sm:$0xf] %vm1488, %v1477
      %1495 = vst.msk [vmem:[%s286 + $0x18] sm:$0xf] %vm1488, %v1478
      %1496 = vst.msk [vmem:[%s286 + $0x1c] sm:$0xf] %vm1488, %v1479
      %1497 = vst.msk [vmem:[%s286 + $0x20] sm:$0xf] %vm1488, %v1480
      %1498 = vst.msk [vmem:[%s286 + $0x24] sm:$0xf] %vm1488, %v1481
      %1499 = vst.msk [vmem:[%s286 + $0x28] sm:$0xf] %vm1488, %v1482
      %1500 = vst.msk [vmem:[%s286 + $0x2c] sm:$0xf] %vm1488, %v1483
      %1501 = vst.msk [vmem:[%s286 + $0x30] sm:$0xf] %vm1488, %v1484
      %1502 = vst.msk [vmem:[%s286 + $0x34] sm:$0xf] %vm1488, %v1485
      %1503 = vst.msk [vmem:[%s286 + $0x38] sm:$0xf] %vm1488, %v1486
      %1504 = vst.msk [vmem:[%s286 + $0x3c] sm:$0xf] %vm1488, %v1487
      %s1505 = smul.u32 8, %s20
      %p1506 = scmp.lt.s32.totalorder %s19, 1
      %s1507 = scalar_select %p1506, %s19, 1
      %p1508 = scmp.lt.s32.totalorder %s1505, 15
      %s1509 = scalar_select %p1508, %s1505, 15
      %s1510 = smul.addr %s1509, 2
      %s1511 = smul.addr %s1507, 32
      %s1512 = sadd.s32 %s1510, %s1511
      %s1513 = smul.addr %s1512, 4
      %s1514 = scalar_lea.vmem %s4, %s1513
      // Predicated region
      $region37: #{conv_block_forward.1} parent=35 // pred_check
        %p1515 = pneg %p147
      $region38: #{conv_block_forward.1} parent=35 // pred_check_branch
        %1517 = sbr.rel (%p1515) target = $region40
      $region39: #{conv_block_forward.1} parent=35 // pred_region
        %s1518 = smul.u32 8, %s20
      $region40: #{conv_block_forward.1} parent=35 // pred_fallthru
        _
    $region36: #{conv_block_forward.1} parent=5 // pred_fallthru
      _
    %p1519 = scmp.le.s32.totalorder 2, %s10
    // Predicated region
    $region41: #{conv_block_forward.1} parent=5 // pred_check
      %p1520 = pneg %p1519
    $region42: #{conv_block_forward.1} parent=5 // pred_check_branch
      %1522 = sbr.rel (%p1520) target = $region44
    $region43: #{conv_block_forward.1} parent=5 // pred_region
      %s1523 = ssub.s32 %s10, 2
      // Predicated region
      $region45: #{conv_block_forward.1} parent=43 // pred_check
        %p1524 = pneg %p153
      $region46: #{conv_block_forward.1} parent=43 // pred_check_branch
        %1526 = sbr.rel (%p1524) target = $region48
      $region47: #{conv_block_forward.1} parent=43 // pred_region
        %s1527 = smul.u32 8, %s22
        %p1528 = scmp.lt.s32.totalorder %s21, 1
        %s1529 = scalar_select %p1528, %s21, 1
        %p1530 = scmp.lt.s32.totalorder %s1527, 15
        %s1531 = scalar_select %p1530, %s1527, 15
        %s1532 = smul.addr %s1531, 2
        %s1533 = smul.addr %s1529, 32
        %s1534 = sadd.s32 %s1532, %s1533
        %s1535 = smul.addr %s1534, 4
        %s1536 = scalar_lea.vmem %s4, %s1535
      $region48: #{conv_block_forward.1} parent=43 // pred_fallthru
        _
    $region44: #{conv_block_forward.1} parent=5 // pred_fallthru
      _
  $region6: #{conv_block_forward.1} parent=0 // loop_footer
    %s14 = sadd.s32 1, %s10
  $region7: #{conv_block_forward.1} parent=0 // loop_footer_branch
    %9 = sbr.rel target = $region3
  $region8: #{conv_block_forward.1} parent=0 // loop_exit
    _

</llo_original>
